<compile_context>
chip_gen: v5e
topology: v5e:2x2
jax: 0.10.0
libtpu: 0.0.40
codegen_flags: <defaults>
</compile_context>

<pallas_src>
import functools

import jax
import jax.numpy as jnp
from jax.experimental import pallas as pl
from jax.experimental.pallas import tpu as pltpu

IN_FEATURES = 768 * 2   # 1536
HIDDEN = 512
N_CLASSES = 2
LANE = 128
SUBLANE = 8


def _round_up(x, m):
    return ((x + m - 1) // m) * m


def _erf(x):
    # Abramowitz & Stegun 7.1.26 polynomial (|err| < 1.5e-7). The divide goes
    # through the EUP via pl.reciprocal(approx=True); exp also uses the EUP
    # slot, so the VALU only sees the fused mul/adds.
    p = 0.3275911
    a1, a2, a3, a4, a5 = (0.254829592, -0.284496736, 1.421413741,
                          -1.453152027, 1.061405429)
    ax = jnp.abs(x)
    t = pl.reciprocal(1.0 + p * ax, approx=True)
    poly = t * (a1 + t * (a2 + t * (a3 + t * (a4 + t * a5))))
    y = 1.0 - poly * jnp.exp(-ax * ax)
    return jnp.where(x >= 0.0, y, -y)


def _gelu_exact(x):
    # PyTorch nn.GELU() default: 0.5 * x * (1 + erf(x / sqrt(2)))
    inv_sqrt2 = 0.7071067811865476
    return 0.5 * x * (1.0 + _erf(x * inv_sqrt2))


def _classifier_kernel(x_ref, w1_ref, b1_ref, w2_ref, b2_ref, o_ref):
    # Fused fc1 + bias + GELU + fc2 + bias for one batch tile.
    # Activations are cast to bf16 in-kernel (weights arrive pre-cast); both
    # matmuls accumulate in f32 on the MXU.
    xb = x_ref[...].astype(jnp.bfloat16)
    h = jnp.dot(xb, w1_ref[...], preferred_element_type=jnp.float32)
    h = _gelu_exact(h + b1_ref[...])
    # TODO(synk): nn.Dropout is identity in eval mode; train-mode stochastic
    # masking (pltpu.prng_seed / prng_random_bits) is not implemented here.
    y = jnp.dot(h.astype(jnp.bfloat16), w2_ref[...],
                preferred_element_type=jnp.float32)
    o_ref[...] = y + b2_ref[...]


def prepare_params(w1, b1, w2, b2):
    """One-time parameter prep (outside the per-call path).

    Casts weights to bf16 for the MXU and pads fc2 to a lane-dense 128-wide
    output so the kernel issues full unmasked vector stores.
    """
    d_in, hidden = w1.shape
    n_cls = w2.shape[1]
    c_pad = _round_up(n_cls, LANE)
    w1b = w1.astype(jnp.bfloat16)
    w2p = jnp.pad(w2, ((0, 0), (0, c_pad - n_cls))).astype(jnp.bfloat16)
    b1r = b1.reshape(1, hidden).astype(jnp.float32)
    b2p = jnp.pad(b2, ((0, c_pad - n_cls),)).reshape(1, c_pad).astype(jnp.float32)
    return w1b, b1r, w2p, b2p


def _pick_tm(b):
    # 256 fills the 256-wide v6e/v7x MXU; only used when the batch is large
    # enough to keep >=2 grid steps (so both v7x TensorCores stay busy).
    # 128 for mid-size batches (also the v5e sweet spot); tiny serving batches
    # get a single sublane-aligned tile.
    if b >= 512:
        return 256
    if b >= 128:
        return 128
    return _round_up(b, SUBLANE)


@functools.partial(jax.jit, static_argnames=("n_classes",))
def classifier_forward(x, w1b, b1r, w2p, b2p, *, n_classes=N_CLASSES):
    b, d_in = x.shape
    hidden = w1b.shape[1]
    c_pad = w2p.shape[1]

    tm = _pick_tm(b)
    grid = (pl.cdiv(b, tm),)   # ragged last block is masked by Pallas

    cost = pl.CostEstimate(
        flops=2 * b * (d_in * hidden + hidden * c_pad),
        transcendentals=2 * b * hidden,  # exp + approx reciprocal per element
        bytes_accessed=(b * d_in * 4            # x (f32 in HBM)
                        + d_in * hidden * 2     # w1 (bf16)
                        + hidden * c_pad * 2    # w2 padded (bf16)
                        + hidden * 4 + c_pad * 4  # biases
                        + b * c_pad * 4),       # output
    )

    out = pl.pallas_call(
        _classifier_kernel,
        out_shape=jax.ShapeDtypeStruct((b, c_pad), jnp.float32),
        grid=grid,
        in_specs=[
            pl.BlockSpec((tm, d_in), lambda i: (i, 0)),
            pl.BlockSpec((d_in, hidden), lambda i: (0, 0)),   # grid-invariant
            pl.BlockSpec((1, hidden), lambda i: (0, 0)),      # grid-invariant
            pl.BlockSpec((hidden, c_pad), lambda i: (0, 0)),  # grid-invariant
            pl.BlockSpec((1, c_pad), lambda i: (0, 0)),       # grid-invariant
        ],
        out_specs=pl.BlockSpec((tm, c_pad), lambda i: (i, 0)),
        compiler_params=pltpu.CompilerParams(
            dimension_semantics=("parallel",),
        ),
        cost_estimate=cost,
    )(x, w1b, b1r, w2p, b2p)

    # Strip lane padding back to the module's true output width.
    return out[:, :n_classes]


if __name__ == "__main__":
    key = jax.random.PRNGKey(0)
    kx, k1, kb1, k2, kb2 = jax.random.split(key, 5)

    batch = 2
    x = jax.random.normal(kx, (batch, IN_FEATURES), dtype=jnp.float32)
    w1 = 0.02 * jax.random.normal(k1, (IN_FEATURES, HIDDEN), dtype=jnp.float32)
    b1 = 0.02 * jax.random.normal(kb1, (HIDDEN,), dtype=jnp.float32)
    w2 = 0.02 * jax.random.normal(k2, (HIDDEN, N_CLASSES), dtype=jnp.float32)
    b2 = 0.02 * jax.random.normal(kb2, (N_CLASSES,), dtype=jnp.float32)

    # One-time parameter prep (bf16 cast + lane-pad fc2) -- done once, like
    # module construction, NOT on every forward call.
    params = prepare_params(w1, b1, w2, b2)

    out = classifier_forward(x, *params)
    out = jax.block_until_ready(out)

    # Pure-JAX f32 reference (eval mode: dropout = identity, exact erf GELU).
    ref = jax.nn.gelu(x @ w1 + b1, approximate=False) @ w2 + b2

    assert out.shape == (batch, N_CLASSES)
    assert out.dtype == jnp.float32
    assert bool(jnp.all(jnp.isfinite(out)))
    # Accuracy contract: bf16 MXU inputs with f32 accumulation + approx
    # reciprocal in the erf polynomial -> looser tolerance than pure f32.
    assert bool(jnp.allclose(out, ref, atol=5e-2, rtol=5e-2)), (out, ref)
    print("KERNEL_OK")
</pallas_src>

<mosaic_0001>
module attributes {stable_mosaic.version = 11 : i64} {
  func.func @_classifier_kernel(%arg0: i32, %arg1: memref<8x1536xf32, #tpu.memory_space<vmem>>, %arg2: memref<1536x512xbf16, #tpu.memory_space<vmem>>, %arg3: memref<1x512xf32, #tpu.memory_space<vmem>>, %arg4: memref<512x128xbf16, #tpu.memory_space<vmem>>, %arg5: memref<1x128xf32, #tpu.memory_space<vmem>>, %arg6: memref<8x128xf32, #tpu.memory_space<vmem>>) attributes {dimension_semantics = [#tpu.dimension_semantics<parallel>], iteration_bounds = array<i64: 1>, scalar_prefetch = 0 : i64, scratch_operands = 0 : i64, tpu.core_type = #tpu.core_type<tc>, window_params = [{transform_indices = @transform_0, window_bounds = array<i64: 8, 1536>}, {pipeline_mode = #tpu.pipeline_mode<synchronous>, transform_indices = @transform_1, window_bounds = array<i64: 1536, 512>}, {pipeline_mode = #tpu.pipeline_mode<synchronous>, transform_indices = @transform_2, window_bounds = array<i64: 1, 512>}, {pipeline_mode = #tpu.pipeline_mode<synchronous>, transform_indices = @transform_3, window_bounds = array<i64: 512, 128>}, {pipeline_mode = #tpu.pipeline_mode<synchronous>, transform_indices = @transform_4, window_bounds = array<i64: 1, 128>}, {transform_indices = @transform_5, window_bounds = array<i64: 8, 128>}]} {
    %c0 = arith.constant 0 : index
    %c0_0 = arith.constant 0 : index
    %0 = vector.load %arg1[%c0, %c0_0] : memref<8x1536xf32, #tpu.memory_space<vmem>>, vector<8x1536xf32>
    %1 = arith.truncf %0 : vector<8x1536xf32> to vector<8x1536xbf16>
    %c0_1 = arith.constant 0 : index
    %c0_2 = arith.constant 0 : index
    %2 = vector.load %arg2[%c0_1, %c0_2] : memref<1536x512xbf16, #tpu.memory_space<vmem>>, vector<1536x512xbf16>
    %cst = arith.constant dense<0.000000e+00> : vector<8x512xf32>
    %3 = tpu.matmul %1, %2, %cst {dimension_numbers = #tpu.dot_dimension_numbers<[1], [0], [0], [1], [0, 0, 1, 1], [], []>} : vector<8x1536xbf16>, vector<1536x512xbf16>, vector<8x512xf32> -> vector<8x512xf32>
    %c0_3 = arith.constant 0 : index
    %c0_4 = arith.constant 0 : index
    %4 = vector.load %arg3[%c0_3, %c0_4] : memref<1x512xf32, #tpu.memory_space<vmem>>, vector<1x512xf32>
    %5 = vector.broadcast %4 : vector<1x512xf32> to vector<8x512xf32>
    %6 = arith.addf %3, %5 : vector<8x512xf32>
    %cst_5 = arith.constant 5.000000e-01 : f32
    %7 = vector.broadcast %cst_5 : f32 to vector<8x512xf32>
    %8 = arith.mulf %7, %6 : vector<8x512xf32>
    %cst_6 = arith.constant 0.707106769 : f32
    %9 = vector.broadcast %cst_6 : f32 to vector<8x512xf32>
    %10 = arith.mulf %6, %9 : vector<8x512xf32>
    %11 = math.absf %10 : vector<8x512xf32>
    %cst_7 = arith.constant 0.327591091 : f32
    %12 = vector.broadcast %cst_7 : f32 to vector<8x512xf32>
    %13 = arith.mulf %12, %11 : vector<8x512xf32>
    %cst_8 = arith.constant 1.000000e+00 : f32
    %14 = vector.broadcast %cst_8 : f32 to vector<8x512xf32>
    %15 = arith.addf %14, %13 : vector<8x512xf32>
    %16 = tpu.reciprocal %15 {approx = true} : vector<8x512xf32> -> vector<8x512xf32>
    %cst_9 = arith.constant 1.06140542 : f32
    %17 = vector.broadcast %cst_9 : f32 to vector<8x512xf32>
    %18 = arith.mulf %16, %17 : vector<8x512xf32>
    %cst_10 = arith.constant -1.45315206 : f32
    %19 = vector.broadcast %cst_10 : f32 to vector<8x512xf32>
    %20 = arith.addf %19, %18 : vector<8x512xf32>
    %21 = arith.mulf %16, %20 : vector<8x512xf32>
    %cst_11 = arith.constant 1.42141378 : f32
    %22 = vector.broadcast %cst_11 : f32 to vector<8x512xf32>
    %23 = arith.addf %22, %21 : vector<8x512xf32>
    %24 = arith.mulf %16, %23 : vector<8x512xf32>
    %cst_12 = arith.constant -0.284496725 : f32
    %25 = vector.broadcast %cst_12 : f32 to vector<8x512xf32>
    %26 = arith.addf %25, %24 : vector<8x512xf32>
    %27 = arith.mulf %16, %26 : vector<8x512xf32>
    %cst_13 = arith.constant 0.254829586 : f32
    %28 = vector.broadcast %cst_13 : f32 to vector<8x512xf32>
    %29 = arith.addf %28, %27 : vector<8x512xf32>
    %30 = arith.mulf %16, %29 : vector<8x512xf32>
    %cst_14 = arith.constant 0.000000e+00 : f32
    %31 = vector.broadcast %cst_14 : f32 to vector<8x512xf32>
    %32 = arith.subf %31, %11 : vector<8x512xf32>
    %33 = arith.mulf %32, %11 : vector<8x512xf32>
    %34 = math.exp %33 : vector<8x512xf32>
    %35 = arith.mulf %30, %34 : vector<8x512xf32>
    %cst_15 = arith.constant 1.000000e+00 : f32
    %36 = vector.broadcast %cst_15 : f32 to vector<8x512xf32>
    %37 = arith.subf %36, %35 : vector<8x512xf32>
    %cst_16 = arith.constant 0.000000e+00 : f32
    %38 = vector.broadcast %cst_16 : f32 to vector<8x512xf32>
    %39 = arith.cmpf oge, %10, %38 : vector<8x512xf32>
    %cst_17 = arith.constant 0.000000e+00 : f32
    %40 = vector.broadcast %cst_17 : f32 to vector<8x512xf32>
    %41 = arith.subf %40, %37 : vector<8x512xf32>
    %42 = arith.select %39, %37, %41 : vector<8x512xi1>, vector<8x512xf32>
    %cst_18 = arith.constant 1.000000e+00 : f32
    %43 = vector.broadcast %cst_18 : f32 to vector<8x512xf32>
    %44 = arith.addf %43, %42 : vector<8x512xf32>
    %45 = arith.mulf %8, %44 : vector<8x512xf32>
    %46 = arith.truncf %45 : vector<8x512xf32> to vector<8x512xbf16>
    %c0_19 = arith.constant 0 : index
    %c0_20 = arith.constant 0 : index
    %47 = vector.load %arg4[%c0_19, %c0_20] : memref<512x128xbf16, #tpu.memory_space<vmem>>, vector<512x128xbf16>
    %cst_21 = arith.constant dense<0.000000e+00> : vector<8x128xf32>
    %48 = tpu.matmul %46, %47, %cst_21 {dimension_numbers = #tpu.dot_dimension_numbers<[1], [0], [0], [1], [0, 0, 1, 1], [], []>} : vector<8x512xbf16>, vector<512x128xbf16>, vector<8x128xf32> -> vector<8x128xf32>
    %c0_22 = arith.constant 0 : index
    %c0_23 = arith.constant 0 : index
    %49 = vector.load %arg5[%c0_22, %c0_23] : memref<1x128xf32, #tpu.memory_space<vmem>>, vector<1x128xf32>
    %50 = vector.broadcast %49 : vector<1x128xf32> to vector<8x128xf32>
    %51 = arith.addf %48, %50 : vector<8x128xf32>
    %c0_24 = arith.constant 0 : index
    %c0_25 = arith.constant 0 : index
    %52 = vector.load %arg6[%c0_24, %c0_25] : memref<8x128xf32, #tpu.memory_space<vmem>>, vector<8x128xf32>
    tpu.vector_store %arg6[%c0_24, %c0_25], %51 {strides = array<i32>} : memref<8x128xf32, #tpu.memory_space<vmem>>, vector<8x128xf32>,
    return
  }
  func.func @transform_0(%arg0: i32) -> (i32, i32) {
    %c0_i32 = arith.constant 0 : i32
    %c0_i32_0 = arith.constant 0 : i32
    return %arg0, %c0_i32 : i32, i32
  }
  func.func @transform_1(%arg0: i32) -> (i32, i32) {
    %c0_i32 = arith.constant 0 : i32
    %c0_i32_0 = arith.constant 0 : i32
    %c0_i32_1 = arith.constant 0 : i32
    return %c0_i32, %c0_i32_0 : i32, i32
  }
  func.func @transform_2(%arg0: i32) -> (i32, i32) {
    %c0_i32 = arith.constant 0 : i32
    %c0_i32_0 = arith.constant 0 : i32
    %c0_i32_1 = arith.constant 0 : i32
    return %c0_i32, %c0_i32_0 : i32, i32
  }
  func.func @transform_3(%arg0: i32) -> (i32, i32) {
    %c0_i32 = arith.constant 0 : i32
    %c0_i32_0 = arith.constant 0 : i32
    %c0_i32_1 = arith.constant 0 : i32
    return %c0_i32, %c0_i32_0 : i32, i32
  }
  func.func @transform_4(%arg0: i32) -> (i32, i32) {
    %c0_i32 = arith.constant 0 : i32
    %c0_i32_0 = arith.constant 0 : i32
    %c0_i32_1 = arith.constant 0 : i32
    return %c0_i32, %c0_i32_0 : i32, i32
  }
  func.func @transform_5(%arg0: i32) -> (i32, i32) {
    %c0_i32 = arith.constant 0 : i32
    %c0_i32_0 = arith.constant 0 : i32
    return %arg0, %c0_i32 : i32, i32
  }
}

</mosaic_0001>

<llo_original>
// kernel: classifier_forward.1
$region0: #{classifier_forward.1}
  #allocation0 [shape = 'u32[]', space=smem, size = 0x4, offset = 0x4, fixed_abs, tag = 'smem constant byte address 0x4 - core index']
  #allocation1 [shape = 'u32[72,128]{1,0:T(1,128)}', space=vmem, size = 0x9000, scoped, tag = 'internal scratch']
  %s0 = inlined_call_operand.hbm [shape: f32[2,1536], index: 0, kind: input, shape index: {}]
  %s1 = inlined_call_operand.hbm [shape: bf16[1536,512], index: 1, kind: input, shape index: {}]
  %s2 = inlined_call_operand.hbm [shape: f32[1,512], index: 2, kind: input, shape index: {}]
  %s3 = inlined_call_operand.hbm [shape: bf16[512,128], index: 3, kind: input, shape index: {}]
  %s4 = inlined_call_operand.hbm [shape: f32[1,128], index: 4, kind: input, shape index: {}]
  %s5 = inlined_call_operand.hbm [shape: f32[2,128], index: 5, kind: output, shape index: {}]
  %s6 = sld [smem:[#allocation0]]
  $region50: #{classifier_forward.1} parent=0
    _
  %s8 = ssub.s32 1, %s6
  %s9 = scalar_select 0, %s8, %s6
  $region1: #{classifier_forward.1} parent=0
    #allocation2 [shape = 'u8[49152]{0}', space=vmem, size = 0xc000, scoped, tag = 'input window, operand 0, single buffered']
    #allocation3 [shape = 's32[1]{0}', space=sflag, size = 0x4, scoped, tag = 'scoped memory for classifier_forward.1']
    #allocation4 [shape = 's32[1]{0}', space=sflag, size = 0x4, scoped, tag = 'scoped memory for classifier_forward.1']
    #allocation5 [shape = 'u8[1572864]{0}', space=vmem, size = 0x180000, scoped, tag = 'input window, operand 1, single buffered']
    #allocation6 [shape = 's32[1]{0}', space=sflag, size = 0x4, scoped, tag = 'scoped memory for classifier_forward.1']
    #allocation7 [shape = 'u8[2048]{0}', space=vmem, size = 0x800, scoped, tag = 'input window, operand 2, single buffered']
    #allocation8 [shape = 'u8[131072]{0}', space=vmem, size = 0x20000, scoped, tag = 'input window, operand 3, single buffered']
    #allocation9 [shape = 's32[1]{0}', space=sflag, size = 0x4, scoped, tag = 'scoped memory for classifier_forward.1']
    #allocation10 [shape = 'u8[512]{0}', space=vmem, size = 0x400, scoped, tag = 'input window, operand 4, single buffered']
    #allocation11 [shape = 'u8[4096]{0}', space=vmem, size = 0x1000, scoped, tag = 'output window, operand 0, single buffered']
    %10 = vsyncpa [#allocation3], 0
    %11 = vsyncpa [#allocation6], 0
    %12 = vsyncpa [#allocation9], 0
    %13 = vsyncpa [#allocation4], 0
    // Predicated region
    $region2: #{classifier_forward.1} parent=1 // pred_check
      _
    $region3: #{classifier_forward.1} parent=1 // pred_check_branch
      %15 = sbr.rel (0) target = $region5
    $region4: #{classifier_forward.1} parent=1 // pred_region
      %17 = vsyncadd [#allocation3], 1152
      %s18 = sshll.u32 %s0, 4
      %s19 = int_to_ptr.hbm [resolvable:$true] %s18
      %s20 = sshll.u32 [#allocation2], 4
      %s21 = int_to_ptr.vmem [resolvable:$true] %s20
      %26 = dma.hbm_to_vmem [thread:$0]  %s19, 384, %s21, [#allocation3], 384, 384, 24
    $region5: #{classifier_forward.1} parent=1 // pred_fallthru
      _
    // Predicated region
    $region6: #{classifier_forward.1} parent=1 // pred_check
      _
    $region7: #{classifier_forward.1} parent=1 // pred_check_branch
      %28 = sbr.rel (0) target = $region9
    $region8: #{classifier_forward.1} parent=1 // pred_region
      %30 = vsyncadd [#allocation6], 0
      %s31 = sshll.u32 %s1, 4
      %s32 = int_to_ptr.hbm [resolvable:$true] %s31
      %s33 = sshll.u32 [#allocation5], 4
      %s34 = int_to_ptr.vmem [resolvable:$true] %s33
      %39 = dma.hbm_to_vmem [thread:$0]  %s32, 49152, %s34, [#allocation6], 256, 256, 16
    $region9: #{classifier_forward.1} parent=1 // pred_fallthru
      _
    // Predicated region
    $region10: #{classifier_forward.1} parent=1 // pred_check
      _
    $region11: #{classifier_forward.1} parent=1 // pred_check_branch
      %41 = sbr.rel (0) target = $region13
    $region12: #{classifier_forward.1} parent=1 // pred_region
      %43 = vsyncadd [#allocation6], 0
      %s45 = sshll.u32 %s2, 4
      %s46 = int_to_ptr.hbm [resolvable:$true] %s45
      %s47 = sshll.u32 [#allocation7], 4
      %s48 = int_to_ptr.vmem [resolvable:$true] %s47
      %50 = dma.hbm_to_vmem [thread:$0]  %s46, 64, %s48, [#allocation6]
    $region13: #{classifier_forward.1} parent=1 // pred_fallthru
      _
    // Predicated region
    $region14: #{classifier_forward.1} parent=1 // pred_check
      _
    $region15: #{classifier_forward.1} parent=1 // pred_check_branch
      %52 = sbr.rel (0) target = $region17
    $region16: #{classifier_forward.1} parent=1 // pred_region
      %54 = vsyncadd [#allocation9], 0
      %s55 = sshll.u32 %s3, 4
      %s56 = int_to_ptr.hbm [resolvable:$true] %s55
      %s57 = sshll.u32 [#allocation8], 4
      %s58 = int_to_ptr.vmem [resolvable:$true] %s57
      %63 = dma.hbm_to_vmem [thread:$0]  %s56, 4096, %s58, [#allocation9], 64, 64, 4
    $region17: #{classifier_forward.1} parent=1 // pred_fallthru
      _
    // Predicated region
    $region18: #{classifier_forward.1} parent=1 // pred_check
      _
    $region19: #{classifier_forward.1} parent=1 // pred_check_branch
      %65 = sbr.rel (0) target = $region21
    $region20: #{classifier_forward.1} parent=1 // pred_region
      %67 = vsyncadd [#allocation9], 0
      %s69 = sshll.u32 %s4, 4
      %s70 = int_to_ptr.hbm [resolvable:$true] %s69
      %s71 = sshll.u32 [#allocation10], 4
      %s72 = int_to_ptr.vmem [resolvable:$true] %s71
      %74 = dma.hbm_to_vmem [thread:$0]  %s70, 16, %s72, [#allocation9]
    $region21: #{classifier_forward.1} parent=1 // pred_fallthru
      _
    // Predicated region
    $region22: #{classifier_forward.1} parent=1 // pred_check
      _
    $region23: #{classifier_forward.1} parent=1 // pred_check_branch
      %76 = sbr.rel (0) target = $region25
    $region24: #{classifier_forward.1} parent=1 // pred_region
      %78 = dma.done [#allocation3], 1536
    $region25: #{classifier_forward.1} parent=1 // pred_fallthru
      _
    // Predicated region
    $region26: #{classifier_forward.1} parent=1 // pred_check
      _
    $region27: #{classifier_forward.1} parent=1 // pred_check_branch
      %80 = sbr.rel (0) target = $region29
    $region28: #{classifier_forward.1} parent=1 // pred_region
      %82 = dma.done [#allocation6], 49152
    $region29: #{classifier_forward.1} parent=1 // pred_fallthru
      _
    // Predicated region
    $region30: #{classifier_forward.1} parent=1 // pred_check
      _
    $region31: #{classifier_forward.1} parent=1 // pred_check_branch
      %84 = sbr.rel (0) target = $region33
    $region32: #{classifier_forward.1} parent=1 // pred_region
      %86 = dma.done [#allocation6], 64
    $region33: #{classifier_forward.1} parent=1 // pred_fallthru
      _
    // Predicated region
    $region34: #{classifier_forward.1} parent=1 // pred_check
      _
    $region35: #{classifier_forward.1} parent=1 // pred_check_branch
      %88 = sbr.rel (0) target = $region37
    $region36: #{classifier_forward.1} parent=1 // pred_region
      %90 = dma.done [#allocation9], 4096
    $region37: #{classifier_forward.1} parent=1 // pred_fallthru
      _
    // Predicated region
    $region38: #{classifier_forward.1} parent=1 // pred_check
      _
    $region39: #{classifier_forward.1} parent=1 // pred_check_branch
      %92 = sbr.rel (0) target = $region41
    $region40: #{classifier_forward.1} parent=1 // pred_region
      %94 = dma.done [#allocation9], 16
    $region41: #{classifier_forward.1} parent=1 // pred_fallthru
      _
    %v95 = vld [vmem:[#allocation2] sm:$0xff]
    %v96 = vld [vmem:[#allocation2 + $0x8] sm:$0xff]
    %v97 = vld [vmem:[#allocation2 + $0x10] sm:$0xff]
    %v98 = vld [vmem:[#allocation2 + $0x18] sm:$0xff]
    %v99 = vld [vmem:[#allocation2 + $0x20] sm:$0xff]
    %v100 = vld [vmem:[#allocation2 + $0x28] sm:$0xff]
    %v101 = vld [vmem:[#allocation2 + $0x30] sm:$0xff]
    %v102 = vld [vmem:[#allocation2 + $0x38] sm:$0xff]
    %v103 = vld [vmem:[#allocation2 + $0x40] sm:$0xff]
    %v104 = vld [vmem:[#allocation2 + $0x48] sm:$0xff]
    %v105 = vld [vmem:[#allocation2 + $0x50] sm:$0xff]
    %v106 = vld [vmem:[#allocation2 + $0x58] sm:$0xff]
    %119 = vst [vmem:[#allocation1] ss:$4 sm:$0xff] %v95
    %s120 = scalar_lea.vmem [#allocation1], 1
    %121 = vst [vmem:[%s120] ss:$4 sm:$0xff] %v98
    %s122 = scalar_lea.vmem [#allocation1], 2
    %123 = vst [vmem:[%s122] ss:$4 sm:$0xff] %v101
    %s124 = scalar_lea.vmem [#allocation1], 3
    %125 = vst [vmem:[%s124] ss:$4 sm:$0xff] %v104
    %s126 = scalar_lea.vmem [#allocation1], 32
    %127 = vst [vmem:[%s126] ss:$4 sm:$0xff] %v96
    %s128 = scalar_lea.vmem [#allocation1], 33
    %129 = vst [vmem:[%s128] ss:$4 sm:$0xff] %v99
    %s130 = scalar_lea.vmem [#allocation1], 34
    %131 = vst [vmem:[%s130] ss:$4 sm:$0xff] %v102
    %s132 = scalar_lea.vmem [#allocation1], 35
    %133 = vst [vmem:[%s132] ss:$4 sm:$0xff] %v105
    %v134 = vld.sshfl [vmem:[#allocation1] sm:$0xff pattern:$0x73625140]
    %v135 = vld.sshfl [vmem:[#allocation1 + $0x8] sm:$0xff pattern:$0x73625140]
    %v136 = vld.sshfl [vmem:[#allocation1 + $0x10] sm:$0xff pattern:$0x73625140]
    %v137 = vld.sshfl [vmem:[#allocation1 + $0x18] sm:$0xff pattern:$0x73625140]
    %v138 = vld.sshfl [vmem:[#allocation1 + $0x20] sm:$0xff pattern:$0x73625140]
    %v139 = vld.sshfl [vmem:[#allocation1 + $0x28] sm:$0xff pattern:$0x73625140]
    %v140 = vld.sshfl [vmem:[#allocation1 + $0x30] sm:$0xff pattern:$0x73625140]
    %v141 = vld.sshfl [vmem:[#allocation1 + $0x38] sm:$0xff pattern:$0x73625140]
    %142 = vst [vmem:[#allocation1] ss:$4 sm:$0xff] %v97
    %143 = vst [vmem:[%s120] ss:$4 sm:$0xff] %v100
    %144 = vst [vmem:[%s122] ss:$4 sm:$0xff] %v103
    %145 = vst [vmem:[%s124] ss:$4 sm:$0xff] %v106
    %v146 = vld.sshfl [vmem:[#allocation1] sm:$0xff pattern:$0x73625140]
    %v147 = vld.sshfl [vmem:[#allocation1 + $0x8] sm:$0xff pattern:$0x73625140]
    %v148 = vld.sshfl [vmem:[#allocation1 + $0x10] sm:$0xff pattern:$0x73625140]
    %v149 = vld.sshfl [vmem:[#allocation1 + $0x18] sm:$0xff pattern:$0x73625140]
    %v162 = vpack.c.bf16 %v134, %v134
    %v163 = vpack.c.bf16 %v135, %v135
    %v164 = vpack.c.bf16 %v136, %v136
    %v165 = vpack.c.bf16 %v137, %v137
    %v166 = vpack.c.bf16 %v138, %v138
    %v167 = vpack.c.bf16 %v139, %v139
    %v168 = vpack.c.bf16 %v140, %v140
    %v169 = vpack.c.bf16 %v141, %v141
    %v170 = vpack.c.bf16 %v146, %v146
    %v171 = vpack.c.bf16 %v147, %v147
    %v172 = vpack.c.bf16 %v148, %v148
    %v173 = vpack.c.bf16 %v149, %v149
    %v174 = vld [vmem:[#allocation5] sm:$0xff]
    %v175 = vld [vmem:[#allocation5 + $0x8] sm:$0xff]
    %v176 = vld [vmem:[#allocation5 + $0x10] sm:$0xff]
    %v177 = vld [vmem:[#allocation5 + $0x18] sm:$0xff]
    %v178 = vld [vmem:[#allocation5 + $0x20] sm:$0xff]
    %v179 = vld [vmem:[#allocation5 + $0x28] sm:$0xff]
    %v180 = vld [vmem:[#allocation5 + $0x30] sm:$0xff]
    %v181 = vld [vmem:[#allocation5 + $0x38] sm:$0xff]
    %v182 = vld [vmem:[#allocation5 + $0x40] sm:$0xff]
    %v183 = vld [vmem:[#allocation5 + $0x48] sm:$0xff]
    %v184 = vld [vmem:[#allocation5 + $0x50] sm:$0xff]
    %v185 = vld [vmem:[#allocation5 + $0x58] sm:$0xff]
    %v186 = vld [vmem:[#allocation5 + $0x60] sm:$0xff]
    %v187 = vld [vmem:[#allocation5 + $0x68] sm:$0xff]
    %v188 = vld [vmem:[#allocation5 + $0x70] sm:$0xff]
    %v189 = vld [vmem:[#allocation5 + $0x78] sm:$0xff]
    %v190 = vld [vmem:[#allocation5 + $0x80] sm:$0xff]
    %v191 = vld [vmem:[#allocation5 + $0x88] sm:$0xff]
    %v192 = vld [vmem:[#allocation5 + $0x90] sm:$0xff]
    %v193 = vld [vmem:[#allocation5 + $0x98] sm:$0xff]
    %v194 = vld [vmem:[#allocation5 + $0xa0] sm:$0xff]
    %v195 = vld [vmem:[#allocation5 + $0xa8] sm:$0xff]
    %v196 = vld [vmem:[#allocation5 + $0xb0] sm:$0xff]
    %v197 = vld [vmem:[#allocation5 + $0xb8] sm:$0xff]
    %v198 = vld [vmem:[#allocation5 + $0xc0] sm:$0xff]
    %v199 = vld [vmem:[#allocation5 + $0xc8] sm:$0xff]
    %v200 = vld [vmem:[#allocation5 + $0xd0] sm:$0xff]
    %v201 = vld [vmem:[#allocation5 + $0xd8] sm:$0xff]
    %v202 = vld [vmem:[#allocation5 + $0xe0] sm:$0xff]
    %v203 = vld [vmem:[#allocation5 + $0xe8] sm:$0xff]
    %v204 = vld [vmem:[#allocation5 + $0xf0] sm:$0xff]
    %v205 = vld [vmem:[#allocation5 + $0xf8] sm:$0xff]
    %v206 = vld [vmem:[#allocation5 + $0x100] sm:$0xff]
    %v207 = vld [vmem:[#allocation5 + $0x108] sm:$0xff]
    %v208 = vld [vmem:[#allocation5 + $0x110] sm:$0xff]
    %v209 = vld [vmem:[#allocation5 + $0x118] sm:$0xff]
    %v210 = vld [vmem:[#allocation5 + $0x120] sm:$0xff]
    %v211 = vld [vmem:[#allocation5 + $0x128] sm:$0xff]
    %v212 = vld [vmem:[#allocation5 + $0x130] sm:$0xff]
    %v213 = vld [vmem:[#allocation5 + $0x138] sm:$0xff]
    %v214 = vld [vmem:[#allocation5 + $0x140] sm:$0xff]
    %v215 = vld [vmem:[#allocation5 + $0x148] sm:$0xff]
    %v216 = vld [vmem:[#allocation5 + $0x150] sm:$0xff]
    %v217 = vld [vmem:[#allocation5 + $0x158] sm:$0xff]
    %v218 = vld [vmem:[#allocation5 + $0x160] sm:$0xff]
    %v219 = vld [vmem:[#allocation5 + $0x168] sm:$0xff]
    %v220 = vld [vmem:[#allocation5 + $0x170] sm:$0xff]
    %v221 = vld [vmem:[#allocation5 + $0x178] sm:$0xff]
    %v222 = vld [vmem:[#allocation5 + $0x180] sm:$0xff]
    %v223 = vld [vmem:[#allocation5 + $0x188] sm:$0xff]
    %v224 = vld [vmem:[#allocation5 + $0x190] sm:$0xff]
    %v225 = vld [vmem:[#allocation5 + $0x198] sm:$0xff]
    %v226 = vld [vmem:[#allocation5 + $0x1a0] sm:$0xff]
    %v227 = vld [vmem:[#allocation5 + $0x1a8] sm:$0xff]
    %v228 = vld [vmem:[#allocation5 + $0x1b0] sm:$0xff]
    %v229 = vld [vmem:[#allocation5 + $0x1b8] sm:$0xff]
    %v230 = vld [vmem:[#allocation5 + $0x1c0] sm:$0xff]
    %v231 = vld [vmem:[#allocation5 + $0x1c8] sm:$0xff]
    %v232 = vld [vmem:[#allocation5 + $0x1d0] sm:$0xff]
    %v233 = vld [vmem:[#allocation5 + $0x1d8] sm:$0xff]
    %v234 = vld [vmem:[#allocation5 + $0x1e0] sm:$0xff]
    %v235 = vld [vmem:[#allocation5 + $0x1e8] sm:$0xff]
    %v236 = vld [vmem:[#allocation5 + $0x1f0] sm:$0xff]
    %v237 = vld [vmem:[#allocation5 + $0x1f8] sm:$0xff]
    %v238 = vld [vmem:[#allocation5 + $0x200] sm:$0xff]
    %v239 = vld [vmem:[#allocation5 + $0x208] sm:$0xff]
    %v240 = vld [vmem:[#allocation5 + $0x210] sm:$0xff]
    %v241 = vld [vmem:[#allocation5 + $0x218] sm:$0xff]
    %v242 = vld [vmem:[#allocation5 + $0x220] sm:$0xff]
    %v243 = vld [vmem:[#allocation5 + $0x228] sm:$0xff]
    %v244 = vld [vmem:[#allocation5 + $0x230] sm:$0xff]
    %v245 = vld [vmem:[#allocation5 + $0x238] sm:$0xff]
    %v246 = vld [vmem:[#allocation5 + $0x240] sm:$0xff]
    %v247 = vld [vmem:[#allocation5 + $0x248] sm:$0xff]
    %v248 = vld [vmem:[#allocation5 + $0x250] sm:$0xff]
    %v249 = vld [vmem:[#allocation5 + $0x258] sm:$0xff]
    %v250 = vld [vmem:[#allocation5 + $0x260] sm:$0xff]
    %v251 = vld [vmem:[#allocation5 + $0x268] sm:$0xff]
    %v252 = vld [vmem:[#allocation5 + $0x270] sm:$0xff]
    %v253 = vld [vmem:[#allocation5 + $0x278] sm:$0xff]
    %v254 = vld [vmem:[#allocation5 + $0x280] sm:$0xff]
    %v255 = vld [vmem:[#allocation5 + $0x288] sm:$0xff]
    %v256 = vld [vmem:[#allocation5 + $0x290] sm:$0xff]
    %v257 = vld [vmem:[#allocation5 + $0x298] sm:$0xff]
    %v258 = vld [vmem:[#allocation5 + $0x2a0] sm:$0xff]
    %v259 = vld [vmem:[#allocation5 + $0x2a8] sm:$0xff]
    %v260 = vld [vmem:[#allocation5 + $0x2b0] sm:$0xff]
    %v261 = vld [vmem:[#allocation5 + $0x2b8] sm:$0xff]
    %v262 = vld [vmem:[#allocation5 + $0x2c0] sm:$0xff]
    %v263 = vld [vmem:[#allocation5 + $0x2c8] sm:$0xff]
    %v264 = vld [vmem:[#allocation5 + $0x2d0] sm:$0xff]
    %v265 = vld [vmem:[#allocation5 + $0x2d8] sm:$0xff]
    %v266 = vld [vmem:[#allocation5 + $0x2e0] sm:$0xff]
    %v267 = vld [vmem:[#allocation5 + $0x2e8] sm:$0xff]
    %v268 = vld [vmem:[#allocation5 + $0x2f0] sm:$0xff]
    %v269 = vld [vmem:[#allocation5 + $0x2f8] sm:$0xff]
    %v270 = vld [vmem:[#allocation5 + $0x300] sm:$0xff]
    %v271 = vld [vmem:[#allocation5 + $0x308] sm:$0xff]
    %v272 = vld [vmem:[#allocation5 + $0x310] sm:$0xff]
    %v273 = vld [vmem:[#allocation5 + $0x318] sm:$0xff]
    %v274 = vld [vmem:[#allocation5 + $0x320] sm:$0xff]
    %v275 = vld [vmem:[#allocation5 + $0x328] sm:$0xff]
    %v276 = vld [vmem:[#allocation5 + $0x330] sm:$0xff]
    %v277 = vld [vmem:[#allocation5 + $0x338] sm:$0xff]
    %v278 = vld [vmem:[#allocation5 + $0x340] sm:$0xff]
    %v279 = vld [vmem:[#allocation5 + $0x348] sm:$0xff]
    %v280 = vld [vmem:[#allocation5 + $0x350] sm:$0xff]
    %v281 = vld [vmem:[#allocation5 + $0x358] sm:$0xff]
    %v282 = vld [vmem:[#allocation5 + $0x360] sm:$0xff]
    %v283 = vld [vmem:[#allocation5 + $0x368] sm:$0xff]
    %v284 = vld [vmem:[#allocation5 + $0x370] sm:$0xff]
    %v285 = vld [vmem:[#allocation5 + $0x378] sm:$0xff]
    %v286 = vld [vmem:[#allocation5 + $0x380] sm:$0xff]
    %v287 = vld [vmem:[#allocation5 + $0x388] sm:$0xff]
    %v288 = vld [vmem:[#allocation5 + $0x390] sm:$0xff]
    %v289 = vld [vmem:[#allocation5 + $0x398] sm:$0xff]
    %v290 = vld [vmem:[#allocation5 + $0x3a0] sm:$0xff]
    %v291 = vld [vmem:[#allocation5 + $0x3a8] sm:$0xff]
    %v292 = vld [vmem:[#allocation5 + $0x3b0] sm:$0xff]
    %v293 = vld [vmem:[#allocation5 + $0x3b8] sm:$0xff]
    %v294 = vld [vmem:[#allocation5 + $0x3c0] sm:$0xff]
    %v295 = vld [vmem:[#allocation5 + $0x3c8] sm:$0xff]
    %v296 = vld [vmem:[#allocation5 + $0x3d0] sm:$0xff]
    %v297 = vld [vmem:[#allocation5 + $0x3d8] sm:$0xff]
    %v298 = vld [vmem:[#allocation5 + $0x3e0] sm:$0xff]
    %v299 = vld [vmem:[#allocation5 + $0x3e8] sm:$0xff]
    %v300 = vld [vmem:[#allocation5 + $0x3f0] sm:$0xff]
    %v301 = vld [vmem:[#allocation5 + $0x3f8] sm:$0xff]
    %v302 = vld [vmem:[#allocation5 + $0x400] sm:$0xff]
    %v303 = vld [vmem:[#allocation5 + $0x408] sm:$0xff]
    %v304 = vld [vmem:[#allocation5 + $0x410] sm:$0xff]
    %v305 = vld [vmem:[#allocation5 + $0x418] sm:$0xff]
    %v306 = vld [vmem:[#allocation5 + $0x420] sm:$0xff]
    %v307 = vld [vmem:[#allocation5 + $0x428] sm:$0xff]
    %v308 = vld [vmem:[#allocation5 + $0x430] sm:$0xff]
    %v309 = vld [vmem:[#allocation5 + $0x438] sm:$0xff]
    %v310 = vld [vmem:[#allocation5 + $0x440] sm:$0xff]
    %v311 = vld [vmem:[#allocation5 + $0x448] sm:$0xff]
    %v312 = vld [vmem:[#allocation5 + $0x450] sm:$0xff]
    %v313 = vld [vmem:[#allocation5 + $0x458] sm:$0xff]
    %v314 = vld [vmem:[#allocation5 + $0x460] sm:$0xff]
    %v315 = vld [vmem:[#allocation5 + $0x468] sm:$0xff]
    %v316 = vld [vmem:[#allocation5 + $0x470] sm:$0xff]
    %v317 = vld [vmem:[#allocation5 + $0x478] sm:$0xff]
    %v318 = vld [vmem:[#allocation5 + $0x480] sm:$0xff]
    %v319 = vld [vmem:[#allocation5 + $0x488] sm:$0xff]
    %v320 = vld [vmem:[#allocation5 + $0x490] sm:$0xff]
    %v321 = vld [vmem:[#allocation5 + $0x498] sm:$0xff]
    %v322 = vld [vmem:[#allocation5 + $0x4a0] sm:$0xff]
    %v323 = vld [vmem:[#allocation5 + $0x4a8] sm:$0xff]
    %v324 = vld [vmem:[#allocation5 + $0x4b0] sm:$0xff]
    %v325 = vld [vmem:[#allocation5 + $0x4b8] sm:$0xff]
    %v326 = vld [vmem:[#allocation5 + $0x4c0] sm:$0xff]
    %v327 = vld [vmem:[#allocation5 + $0x4c8] sm:$0xff]
    %v328 = vld [vmem:[#allocation5 + $0x4d0] sm:$0xff]
    %v329 = vld [vmem:[#allocation5 + $0x4d8] sm:$0xff]
    %v330 = vld [vmem:[#allocation5 + $0x4e0] sm:$0xff]
    %v331 = vld [vmem:[#allocation5 + $0x4e8] sm:$0xff]
    %v332 = vld [vmem:[#allocation5 + $0x4f0] sm:$0xff]
    %v333 = vld [vmem:[#allocation5 + $0x4f8] sm:$0xff]
    %v334 = vld [vmem:[#allocation5 + $0x500] sm:$0xff]
    %v335 = vld [vmem:[#allocation5 + $0x508] sm:$0xff]
    %v336 = vld [vmem:[#allocation5 + $0x510] sm:$0xff]
    %v337 = vld [vmem:[#allocation5 + $0x518] sm:$0xff]
    %v338 = vld [vmem:[#allocation5 + $0x520] sm:$0xff]
    %v339 = vld [vmem:[#allocation5 + $0x528] sm:$0xff]
    %v340 = vld [vmem:[#allocation5 + $0x530] sm:$0xff]
    %v341 = vld [vmem:[#allocation5 + $0x538] sm:$0xff]
    %v342 = vld [vmem:[#allocation5 + $0x540] sm:$0xff]
    %v343 = vld [vmem:[#allocation5 + $0x548] sm:$0xff]
    %v344 = vld [vmem:[#allocation5 + $0x550] sm:$0xff]
    %v345 = vld [vmem:[#allocation5 + $0x558] sm:$0xff]
    %v346 = vld [vmem:[#allocation5 + $0x560] sm:$0xff]
    %v347 = vld [vmem:[#allocation5 + $0x568] sm:$0xff]
    %v348 = vld [vmem:[#allocation5 + $0x570] sm:$0xff]
    %v349 = vld [vmem:[#allocation5 + $0x578] sm:$0xff]
    %v350 = vld [vmem:[#allocation5 + $0x580] sm:$0xff]
    %v351 = vld [vmem:[#allocation5 + $0x588] sm:$0xff]
    %v352 = vld [vmem:[#allocation5 + $0x590] sm:$0xff]
    %v353 = vld [vmem:[#allocation5 + $0x598] sm:$0xff]
    %v354 = vld [vmem:[#allocation5 + $0x5a0] sm:$0xff]
    %v355 = vld [vmem:[#allocation5 + $0x5a8] sm:$0xff]
    %v356 = vld [vmem:[#allocation5 + $0x5b0] sm:$0xff]
    %v357 = vld [vmem:[#allocation5 + $0x5b8] sm:$0xff]
    %v358 = vld [vmem:[#allocation5 + $0x5c0] sm:$0xff]
    %v359 = vld [vmem:[#allocation5 + $0x5c8] sm:$0xff]
    %v360 = vld [vmem:[#allocation5 + $0x5d0] sm:$0xff]
    %v361 = vld [vmem:[#allocation5 + $0x5d8] sm:$0xff]
    %v362 = vld [vmem:[#allocation5 + $0x5e0] sm:$0xff]
    %v363 = vld [vmem:[#allocation5 + $0x5e8] sm:$0xff]
    %v364 = vld [vmem:[#allocation5 + $0x5f0] sm:$0xff]
    %v365 = vld [vmem:[#allocation5 + $0x5f8] sm:$0xff]
    %v366 = vld [vmem:[#allocation5 + $0x600] sm:$0xff]
    %v367 = vld [vmem:[#allocation5 + $0x608] sm:$0xff]
    %v368 = vld [vmem:[#allocation5 + $0x610] sm:$0xff]
    %v369 = vld [vmem:[#allocation5 + $0x618] sm:$0xff]
    %v370 = vld [vmem:[#allocation5 + $0x620] sm:$0xff]
    %v371 = vld [vmem:[#allocation5 + $0x628] sm:$0xff]
    %v372 = vld [vmem:[#allocation5 + $0x630] sm:$0xff]
    %v373 = vld [vmem:[#allocation5 + $0x638] sm:$0xff]
    %v374 = vld [vmem:[#allocation5 + $0x640] sm:$0xff]
    %v375 = vld [vmem:[#allocation5 + $0x648] sm:$0xff]
    %v376 = vld [vmem:[#allocation5 + $0x650] sm:$0xff]
    %v377 = vld [vmem:[#allocation5 + $0x658] sm:$0xff]
    %v378 = vld [vmem:[#allocation5 + $0x660] sm:$0xff]
    %v379 = vld [vmem:[#allocation5 + $0x668] sm:$0xff]
    %v380 = vld [vmem:[#allocation5 + $0x670] sm:$0xff]
    %v381 = vld [vmem:[#allocation5 + $0x678] sm:$0xff]
    %v382 = vld [vmem:[#allocation5 + $0x680] sm:$0xff]
    %v383 = vld [vmem:[#allocation5 + $0x688] sm:$0xff]
    %v384 = vld [vmem:[#allocation5 + $0x690] sm:$0xff]
    %v385 = vld [vmem:[#allocation5 + $0x698] sm:$0xff]
    %v386 = vld [vmem:[#allocation5 + $0x6a0] sm:$0xff]
    %v387 = vld [vmem:[#allocation5 + $0x6a8] sm:$0xff]
    %v388 = vld [vmem:[#allocation5 + $0x6b0] sm:$0xff]
    %v389 = vld [vmem:[#allocation5 + $0x6b8] sm:$0xff]
    %v390 = vld [vmem:[#allocation5 + $0x6c0] sm:$0xff]
    %v391 = vld [vmem:[#allocation5 + $0x6c8] sm:$0xff]
    %v392 = vld [vmem:[#allocation5 + $0x6d0] sm:$0xff]
    %v393 = vld [vmem:[#allocation5 + $0x6d8] sm:$0xff]
    %v394 = vld [vmem:[#allocation5 + $0x6e0] sm:$0xff]
    %v395 = vld [vmem:[#allocation5 + $0x6e8] sm:$0xff]
    %v396 = vld [vmem:[#allocation5 + $0x6f0] sm:$0xff]
    %v397 = vld [vmem:[#allocation5 + $0x6f8] sm:$0xff]
    %v398 = vld [vmem:[#allocation5 + $0x700] sm:$0xff]
    %v399 = vld [vmem:[#allocation5 + $0x708] sm:$0xff]
    %v400 = vld [vmem:[#allocation5 + $0x710] sm:$0xff]
    %v401 = vld [vmem:[#allocation5 + $0x718] sm:$0xff]
    %v402 = vld [vmem:[#allocation5 + $0x720] sm:$0xff]
    %v403 = vld [vmem:[#allocation5 + $0x728] sm:$0xff]
    %v404 = vld [vmem:[#allocation5 + $0x730] sm:$0xff]
    %v405 = vld [vmem:[#allocation5 + $0x738] sm:$0xff]
    %v406 = vld [vmem:[#allocation5 + $0x740] sm:$0xff]
    %v407 = vld [vmem:[#allocation5 + $0x748] sm:$0xff]
    %v408 = vld [vmem:[#allocation5 + $0x750] sm:$0xff]
    %v409 = vld [vmem:[#allocation5 + $0x758] sm:$0xff]
    %v410 = vld [vmem:[#allocation5 + $0x760] sm:$0xff]
    %v411 = vld [vmem:[#allocation5 + $0x768] sm:$0xff]
    %v412 = vld [vmem:[#allocation5 + $0x770] sm:$0xff]
    %v413 = vld [vmem:[#allocation5 + $0x778] sm:$0xff]
    %v414 = vld [vmem:[#allocation5 + $0x780] sm:$0xff]
    %v415 = vld [vmem:[#allocation5 + $0x788] sm:$0xff]
    %v416 = vld [vmem:[#allocation5 + $0x790] sm:$0xff]
    %v417 = vld [vmem:[#allocation5 + $0x798] sm:$0xff]
    %v418 = vld [vmem:[#allocation5 + $0x7a0] sm:$0xff]
    %v419 = vld [vmem:[#allocation5 + $0x7a8] sm:$0xff]
    %v420 = vld [vmem:[#allocation5 + $0x7b0] sm:$0xff]
    %v421 = vld [vmem:[#allocation5 + $0x7b8] sm:$0xff]
    %v422 = vld [vmem:[#allocation5 + $0x7c0] sm:$0xff]
    %v423 = vld [vmem:[#allocation5 + $0x7c8] sm:$0xff]
    %v424 = vld [vmem:[#allocation5 + $0x7d0] sm:$0xff]
    %v425 = vld [vmem:[#allocation5 + $0x7d8] sm:$0xff]
    %v426 = vld [vmem:[#allocation5 + $0x7e0] sm:$0xff]
    %v427 = vld [vmem:[#allocation5 + $0x7e8] sm:$0xff]
    %v428 = vld [vmem:[#allocation5 + $0x7f0] sm:$0xff]
    %v429 = vld [vmem:[#allocation5 + $0x7f8] sm:$0xff]
    %v430 = vld [vmem:[#allocation5 + $0x800] sm:$0xff]
    %v431 = vld [vmem:[#allocation5 + $0x808] sm:$0xff]
    %v432 = vld [vmem:[#allocation5 + $0x810] sm:$0xff]
    %v433 = vld [vmem:[#allocation5 + $0x818] sm:$0xff]
    %v434 = vld [vmem:[#allocation5 + $0x820] sm:$0xff]
    %v435 = vld [vmem:[#allocation5 + $0x828] sm:$0xff]
    %v436 = vld [vmem:[#allocation5 + $0x830] sm:$0xff]
    %v437 = vld [vmem:[#allocation5 + $0x838] sm:$0xff]
    %v438 = vld [vmem:[#allocation5 + $0x840] sm:$0xff]
    %v439 = vld [vmem:[#allocation5 + $0x848] sm:$0xff]
    %v440 = vld [vmem:[#allocation5 + $0x850] sm:$0xff]
    %v441 = vld [vmem:[#allocation5 + $0x858] sm:$0xff]
    %v442 = vld [vmem:[#allocation5 + $0x860] sm:$0xff]
    %v443 = vld [vmem:[#allocation5 + $0x868] sm:$0xff]
    %v444 = vld [vmem:[#allocation5 + $0x870] sm:$0xff]
    %v445 = vld [vmem:[#allocation5 + $0x878] sm:$0xff]
    %v446 = vld [vmem:[#allocation5 + $0x880] sm:$0xff]
    %v447 = vld [vmem:[#allocation5 + $0x888] sm:$0xff]
    %v448 = vld [vmem:[#allocation5 + $0x890] sm:$0xff]
    %v449 = vld [vmem:[#allocation5 + $0x898] sm:$0xff]
    %v450 = vld [vmem:[#allocation5 + $0x8a0] sm:$0xff]
    %v451 = vld [vmem:[#allocation5 + $0x8a8] sm:$0xff]
    %v452 = vld [vmem:[#allocation5 + $0x8b0] sm:$0xff]
    %v453 = vld [vmem:[#allocation5 + $0x8b8] sm:$0xff]
    %v454 = vld [vmem:[#allocation5 + $0x8c0] sm:$0xff]
    %v455 = vld [vmem:[#allocation5 + $0x8c8] sm:$0xff]
    %v456 = vld [vmem:[#allocation5 + $0x8d0] sm:$0xff]
    %v457 = vld [vmem:[#allocation5 + $0x8d8] sm:$0xff]
    %v458 = vld [vmem:[#allocation5 + $0x8e0] sm:$0xff]
    %v459 = vld [vmem:[#allocation5 + $0x8e8] sm:$0xff]
    %v460 = vld [vmem:[#allocation5 + $0x8f0] sm:$0xff]
    %v461 = vld [vmem:[#allocation5 + $0x8f8] sm:$0xff]
    %v462 = vld [vmem:[#allocation5 + $0x900] sm:$0xff]
    %v463 = vld [vmem:[#allocation5 + $0x908] sm:$0xff]
    %v464 = vld [vmem:[#allocation5 + $0x910] sm:$0xff]
    %v465 = vld [vmem:[#allocation5 + $0x918] sm:$0xff]
    %v466 = vld [vmem:[#allocation5 + $0x920] sm:$0xff]
    %v467 = vld [vmem:[#allocation5 + $0x928] sm:$0xff]
    %v468 = vld [vmem:[#allocation5 + $0x930] sm:$0xff]
    %v469 = vld [vmem:[#allocation5 + $0x938] sm:$0xff]
    %v470 = vld [vmem:[#allocation5 + $0x940] sm:$0xff]
    %v471 = vld [vmem:[#allocation5 + $0x948] sm:$0xff]
    %v472 = vld [vmem:[#allocation5 + $0x950] sm:$0xff]
    %v473 = vld [vmem:[#allocation5 + $0x958] sm:$0xff]
    %v474 = vld [vmem:[#allocation5 + $0x960] sm:$0xff]
    %v475 = vld [vmem:[#allocation5 + $0x968] sm:$0xff]
    %v476 = vld [vmem:[#allocation5 + $0x970] sm:$0xff]
    %v477 = vld [vmem:[#allocation5 + $0x978] sm:$0xff]
    %v478 = vld [vmem:[#allocation5 + $0x980] sm:$0xff]
    %v479 = vld [vmem:[#allocation5 + $0x988] sm:$0xff]
    %v480 = vld [vmem:[#allocation5 + $0x990] sm:$0xff]
    %v481 = vld [vmem:[#allocation5 + $0x998] sm:$0xff]
    %v482 = vld [vmem:[#allocation5 + $0x9a0] sm:$0xff]
    %v483 = vld [vmem:[#allocation5 + $0x9a8] sm:$0xff]
    %v484 = vld [vmem:[#allocation5 + $0x9b0] sm:$0xff]
    %v485 = vld [vmem:[#allocation5 + $0x9b8] sm:$0xff]
    %v486 = vld [vmem:[#allocation5 + $0x9c0] sm:$0xff]
    %v487 = vld [vmem:[#allocation5 + $0x9c8] sm:$0xff]
    %v488 = vld [vmem:[#allocation5 + $0x9d0] sm:$0xff]
    %v489 = vld [vmem:[#allocation5 + $0x9d8] sm:$0xff]
    %v490 = vld [vmem:[#allocation5 + $0x9e0] sm:$0xff]
    %v491 = vld [vmem:[#allocation5 + $0x9e8] sm:$0xff]
    %v492 = vld [vmem:[#allocation5 + $0x9f0] sm:$0xff]
    %v493 = vld [vmem:[#allocation5 + $0x9f8] sm:$0xff]
    %v494 = vld [vmem:[#allocation5 + $0xa00] sm:$0xff]
    %v495 = vld [vmem:[#allocation5 + $0xa08] sm:$0xff]
    %v496 = vld [vmem:[#allocation5 + $0xa10] sm:$0xff]
    %v497 = vld [vmem:[#allocation5 + $0xa18] sm:$0xff]
    %v498 = vld [vmem:[#allocation5 + $0xa20] sm:$0xff]
    %v499 = vld [vmem:[#allocation5 + $0xa28] sm:$0xff]
    %v500 = vld [vmem:[#allocation5 + $0xa30] sm:$0xff]
    %v501 = vld [vmem:[#allocation5 + $0xa38] sm:$0xff]
    %v502 = vld [vmem:[#allocation5 + $0xa40] sm:$0xff]
    %v503 = vld [vmem:[#allocation5 + $0xa48] sm:$0xff]
    %v504 = vld [vmem:[#allocation5 + $0xa50] sm:$0xff]
    %v505 = vld [vmem:[#allocation5 + $0xa58] sm:$0xff]
    %v506 = vld [vmem:[#allocation5 + $0xa60] sm:$0xff]
    %v507 = vld [vmem:[#allocation5 + $0xa68] sm:$0xff]
    %v508 = vld [vmem:[#allocation5 + $0xa70] sm:$0xff]
    %v509 = vld [vmem:[#allocation5 + $0xa78] sm:$0xff]
    %v510 = vld [vmem:[#allocation5 + $0xa80] sm:$0xff]
    %v511 = vld [vmem:[#allocation5 + $0xa88] sm:$0xff]
    %v512 = vld [vmem:[#allocation5 + $0xa90] sm:$0xff]
    %v513 = vld [vmem:[#allocation5 + $0xa98] sm:$0xff]
    %v514 = vld [vmem:[#allocation5 + $0xaa0] sm:$0xff]
    %v515 = vld [vmem:[#allocation5 + $0xaa8] sm:$0xff]
    %v516 = vld [vmem:[#allocation5 + $0xab0] sm:$0xff]
    %v517 = vld [vmem:[#allocation5 + $0xab8] sm:$0xff]
    %v518 = vld [vmem:[#allocation5 + $0xac0] sm:$0xff]
    %v519 = vld [vmem:[#allocation5 + $0xac8] sm:$0xff]
    %v520 = vld [vmem:[#allocation5 + $0xad0] sm:$0xff]
    %v521 = vld [vmem:[#allocation5 + $0xad8] sm:$0xff]
    %v522 = vld [vmem:[#allocation5 + $0xae0] sm:$0xff]
    %v523 = vld [vmem:[#allocation5 + $0xae8] sm:$0xff]
    %v524 = vld [vmem:[#allocation5 + $0xaf0] sm:$0xff]
    %v525 = vld [vmem:[#allocation5 + $0xaf8] sm:$0xff]
    %v526 = vld [vmem:[#allocation5 + $0xb00] sm:$0xff]
    %v527 = vld [vmem:[#allocation5 + $0xb08] sm:$0xff]
    %v528 = vld [vmem:[#allocation5 + $0xb10] sm:$0xff]
    %v529 = vld [vmem:[#allocation5 + $0xb18] sm:$0xff]
    %v530 = vld [vmem:[#allocation5 + $0xb20] sm:$0xff]
    %v531 = vld [vmem:[#allocation5 + $0xb28] sm:$0xff]
    %v532 = vld [vmem:[#allocation5 + $0xb30] sm:$0xff]
    %v533 = vld [vmem:[#allocation5 + $0xb38] sm:$0xff]
    %v534 = vld [vmem:[#allocation5 + $0xb40] sm:$0xff]
    %v535 = vld [vmem:[#allocation5 + $0xb48] sm:$0xff]
    %v536 = vld [vmem:[#allocation5 + $0xb50] sm:$0xff]
    %v537 = vld [vmem:[#allocation5 + $0xb58] sm:$0xff]
    %v538 = vld [vmem:[#allocation5 + $0xb60] sm:$0xff]
    %v539 = vld [vmem:[#allocation5 + $0xb68] sm:$0xff]
    %v540 = vld [vmem:[#allocation5 + $0xb70] sm:$0xff]
    %v541 = vld [vmem:[#allocation5 + $0xb78] sm:$0xff]
    %v542 = vld [vmem:[#allocation5 + $0xb80] sm:$0xff]
    %v543 = vld [vmem:[#allocation5 + $0xb88] sm:$0xff]
    %v544 = vld [vmem:[#allocation5 + $0xb90] sm:$0xff]
    %v545 = vld [vmem:[#allocation5 + $0xb98] sm:$0xff]
    %v546 = vld [vmem:[#allocation5 + $0xba0] sm:$0xff]
    %v547 = vld [vmem:[#allocation5 + $0xba8] sm:$0xff]
    %v548 = vld [vmem:[#allocation5 + $0xbb0] sm:$0xff]
    %v549 = vld [vmem:[#allocation5 + $0xbb8] sm:$0xff]
    %v550 = vld [vmem:[#allocation5 + $0xbc0] sm:$0xff]
    %v551 = vld [vmem:[#allocation5 + $0xbc8] sm:$0xff]
    %v552 = vld [vmem:[#allocation5 + $0xbd0] sm:$0xff]
    %v553 = vld [vmem:[#allocation5 + $0xbd8] sm:$0xff]
    %v554 = vld [vmem:[#allocation5 + $0xbe0] sm:$0xff]
    %v555 = vld [vmem:[#allocation5 + $0xbe8] sm:$0xff]
    %v556 = vld [vmem:[#allocation5 + $0xbf0] sm:$0xff]
    %v557 = vld [vmem:[#allocation5 + $0xbf8] sm:$0xff]
    %v558 = vld [vmem:[#allocation7] sm:$0xf]
    %v560 = vperm.slane %v558, 0
    %v561 = vperm.slane %v558, 1
    %v562 = vperm.slane %v558, 2
    %v563 = vperm.slane %v558, 3
    %v952 = vunpack.c.l.b16 %v174
    %v953 = vunpack.c.h.b16 %v174
    %v954 = vunpack.c.l.b16 %v175
    %v955 = vunpack.c.h.b16 %v175
    %v956 = vunpack.c.l.b16 %v176
    %v957 = vunpack.c.h.b16 %v176
    %v958 = vunpack.c.l.b16 %v177
    %v959 = vunpack.c.h.b16 %v177
    %v960 = vunpack.c.l.b16 %v178
    %v961 = vunpack.c.h.b16 %v178
    %v962 = vunpack.c.l.b16 %v179
    %v963 = vunpack.c.h.b16 %v179
    %v964 = vunpack.c.l.b16 %v180
    %v965 = vunpack.c.h.b16 %v180
    %v966 = vunpack.c.l.b16 %v181
    %v967 = vunpack.c.h.b16 %v181
    %v968 = vunpack.c.l.b16 %v182
    %v969 = vunpack.c.h.b16 %v182
    %v970 = vunpack.c.l.b16 %v183
    %v971 = vunpack.c.h.b16 %v183
    %v972 = vunpack.c.l.b16 %v184
    %v973 = vunpack.c.h.b16 %v184
    %v974 = vunpack.c.l.b16 %v185
    %v975 = vunpack.c.h.b16 %v185
    %v976 = vunpack.c.l.b16 %v186
    %v977 = vunpack.c.h.b16 %v186
    %v978 = vunpack.c.l.b16 %v187
    %v979 = vunpack.c.h.b16 %v187
    %v980 = vunpack.c.l.b16 %v188
    %v981 = vunpack.c.h.b16 %v188
    %v982 = vunpack.c.l.b16 %v189
    %v983 = vunpack.c.h.b16 %v189
    %v984 = vunpack.c.l.b16 %v190
    %v985 = vunpack.c.h.b16 %v190
    %v986 = vunpack.c.l.b16 %v191
    %v987 = vunpack.c.h.b16 %v191
    %v988 = vunpack.c.l.b16 %v192
    %v989 = vunpack.c.h.b16 %v192
    %v990 = vunpack.c.l.b16 %v193
    %v991 = vunpack.c.h.b16 %v193
    %v992 = vunpack.c.l.b16 %v194
    %v993 = vunpack.c.h.b16 %v194
    %v994 = vunpack.c.l.b16 %v195
    %v995 = vunpack.c.h.b16 %v195
    %v996 = vunpack.c.l.b16 %v196
    %v997 = vunpack.c.h.b16 %v196
    %v998 = vunpack.c.l.b16 %v197
    %v999 = vunpack.c.h.b16 %v197
    %v1000 = vunpack.c.l.b16 %v198
    %v1001 = vunpack.c.h.b16 %v198
    %v1002 = vunpack.c.l.b16 %v199
    %v1003 = vunpack.c.h.b16 %v199
    %v1004 = vunpack.c.l.b16 %v200
    %v1005 = vunpack.c.h.b16 %v200
    %v1006 = vunpack.c.l.b16 %v201
    %v1007 = vunpack.c.h.b16 %v201
    %v1008 = vunpack.c.l.b16 %v202
    %v1009 = vunpack.c.h.b16 %v202
    %v1010 = vunpack.c.l.b16 %v203
    %v1011 = vunpack.c.h.b16 %v203
    %v1012 = vunpack.c.l.b16 %v204
    %v1013 = vunpack.c.h.b16 %v204
    %v1014 = vunpack.c.l.b16 %v205
    %v1015 = vunpack.c.h.b16 %v205
    %v1016 = vunpack.c.l.b16 %v206
    %v1017 = vunpack.c.h.b16 %v206
    %v1018 = vunpack.c.l.b16 %v207
    %v1019 = vunpack.c.h.b16 %v207
    %v1020 = vunpack.c.l.b16 %v208
    %v1021 = vunpack.c.h.b16 %v208
    %v1022 = vunpack.c.l.b16 %v209
    %v1023 = vunpack.c.h.b16 %v209
    %v1024 = vunpack.c.l.b16 %v210
    %v1025 = vunpack.c.h.b16 %v210
    %v1026 = vunpack.c.l.b16 %v211
    %v1027 = vunpack.c.h.b16 %v211
    %v1028 = vunpack.c.l.b16 %v212
    %v1029 = vunpack.c.h.b16 %v212
    %v1030 = vunpack.c.l.b16 %v213
    %v1031 = vunpack.c.h.b16 %v213
    %v1032 = vunpack.c.l.b16 %v214
    %v1033 = vunpack.c.h.b16 %v214
    %v1034 = vunpack.c.l.b16 %v215
    %v1035 = vunpack.c.h.b16 %v215
    %v1036 = vunpack.c.l.b16 %v216
    %v1037 = vunpack.c.h.b16 %v216
    %v1038 = vunpack.c.l.b16 %v217
    %v1039 = vunpack.c.h.b16 %v217
    %v1040 = vunpack.c.l.b16 %v218
    %v1041 = vunpack.c.h.b16 %v218
    %v1042 = vunpack.c.l.b16 %v219
    %v1043 = vunpack.c.h.b16 %v219
    %v1044 = vunpack.c.l.b16 %v220
    %v1045 = vunpack.c.h.b16 %v220
    %v1046 = vunpack.c.l.b16 %v221
    %v1047 = vunpack.c.h.b16 %v221
    %v1048 = vunpack.c.l.b16 %v222
    %v1049 = vunpack.c.h.b16 %v222
    %v1050 = vunpack.c.l.b16 %v223
    %v1051 = vunpack.c.h.b16 %v223
    %v1052 = vunpack.c.l.b16 %v224
    %v1053 = vunpack.c.h.b16 %v224
    %v1054 = vunpack.c.l.b16 %v225
    %v1055 = vunpack.c.h.b16 %v225
    %v1056 = vunpack.c.l.b16 %v226
    %v1057 = vunpack.c.h.b16 %v226
    %v1058 = vunpack.c.l.b16 %v227
    %v1059 = vunpack.c.h.b16 %v227
    %v1060 = vunpack.c.l.b16 %v228
    %v1061 = vunpack.c.h.b16 %v228
    %v1062 = vunpack.c.l.b16 %v229
    %v1063 = vunpack.c.h.b16 %v229
    %v1064 = vunpack.c.l.b16 %v230
    %v1065 = vunpack.c.h.b16 %v230
    %v1066 = vunpack.c.l.b16 %v231
    %v1067 = vunpack.c.h.b16 %v231
    %v1068 = vunpack.c.l.b16 %v232
    %v1069 = vunpack.c.h.b16 %v232
    %v1070 = vunpack.c.l.b16 %v233
    %v1071 = vunpack.c.h.b16 %v233
    %v1072 = vunpack.c.l.b16 %v234
    %v1073 = vunpack.c.h.b16 %v234
    %v1074 = vunpack.c.l.b16 %v235
    %v1075 = vunpack.c.h.b16 %v235
    %v1076 = vunpack.c.l.b16 %v236
    %v1077 = vunpack.c.h.b16 %v236
    %v1078 = vunpack.c.l.b16 %v237
    %v1079 = vunpack.c.h.b16 %v237
    %v1080 = vunpack.c.l.b16 %v238
    %v1081 = vunpack.c.h.b16 %v238
    %v1082 = vunpack.c.l.b16 %v239
    %v1083 = vunpack.c.h.b16 %v239
    %v1084 = vunpack.c.l.b16 %v240
    %v1085 = vunpack.c.h.b16 %v240
    %v1086 = vunpack.c.l.b16 %v241
    %v1087 = vunpack.c.h.b16 %v241
    %v1088 = vunpack.c.l.b16 %v242
    %v1089 = vunpack.c.h.b16 %v242
    %v1090 = vunpack.c.l.b16 %v243
    %v1091 = vunpack.c.h.b16 %v243
    %v1092 = vunpack.c.l.b16 %v244
    %v1093 = vunpack.c.h.b16 %v244
    %v1094 = vunpack.c.l.b16 %v245
    %v1095 = vunpack.c.h.b16 %v245
    %v1096 = vunpack.c.l.b16 %v246
    %v1097 = vunpack.c.h.b16 %v246
    %v1098 = vunpack.c.l.b16 %v247
    %v1099 = vunpack.c.h.b16 %v247
    %v1100 = vunpack.c.l.b16 %v248
    %v1101 = vunpack.c.h.b16 %v248
    %v1102 = vunpack.c.l.b16 %v249
    %v1103 = vunpack.c.h.b16 %v249
    %v1104 = vunpack.c.l.b16 %v250
    %v1105 = vunpack.c.h.b16 %v250
    %v1106 = vunpack.c.l.b16 %v251
    %v1107 = vunpack.c.h.b16 %v251
    %v1108 = vunpack.c.l.b16 %v252
    %v1109 = vunpack.c.h.b16 %v252
    %v1110 = vunpack.c.l.b16 %v253
    %v1111 = vunpack.c.h.b16 %v253
    %v1112 = vunpack.c.l.b16 %v254
    %v1113 = vunpack.c.h.b16 %v254
    %v1114 = vunpack.c.l.b16 %v255
    %v1115 = vunpack.c.h.b16 %v255
    %v1116 = vunpack.c.l.b16 %v256
    %v1117 = vunpack.c.h.b16 %v256
    %v1118 = vunpack.c.l.b16 %v257
    %v1119 = vunpack.c.h.b16 %v257
    %v1120 = vunpack.c.l.b16 %v258
    %v1121 = vunpack.c.h.b16 %v258
    %v1122 = vunpack.c.l.b16 %v259
    %v1123 = vunpack.c.h.b16 %v259
    %v1124 = vunpack.c.l.b16 %v260
    %v1125 = vunpack.c.h.b16 %v260
    %v1126 = vunpack.c.l.b16 %v261
    %v1127 = vunpack.c.h.b16 %v261
    %v1128 = vunpack.c.l.b16 %v262
    %v1129 = vunpack.c.h.b16 %v262
    %v1130 = vunpack.c.l.b16 %v263
    %v1131 = vunpack.c.h.b16 %v263
    %v1132 = vunpack.c.l.b16 %v264
    %v1133 = vunpack.c.h.b16 %v264
    %v1134 = vunpack.c.l.b16 %v265
    %v1135 = vunpack.c.h.b16 %v265
    %v1136 = vunpack.c.l.b16 %v266
    %v1137 = vunpack.c.h.b16 %v266
    %v1138 = vunpack.c.l.b16 %v267
    %v1139 = vunpack.c.h.b16 %v267
    %v1140 = vunpack.c.l.b16 %v268
    %v1141 = vunpack.c.h.b16 %v268
    %v1142 = vunpack.c.l.b16 %v269
    %v1143 = vunpack.c.h.b16 %v269
    %v1144 = vunpack.c.l.b16 %v270
    %v1145 = vunpack.c.h.b16 %v270
    %v1146 = vunpack.c.l.b16 %v271
    %v1147 = vunpack.c.h.b16 %v271
    %v1148 = vunpack.c.l.b16 %v272
    %v1149 = vunpack.c.h.b16 %v272
    %v1150 = vunpack.c.l.b16 %v273
    %v1151 = vunpack.c.h.b16 %v273
    %v1152 = vunpack.c.l.b16 %v274
    %v1153 = vunpack.c.h.b16 %v274
    %v1154 = vunpack.c.l.b16 %v275
    %v1155 = vunpack.c.h.b16 %v275
    %v1156 = vunpack.c.l.b16 %v276
    %v1157 = vunpack.c.h.b16 %v276
    %v1158 = vunpack.c.l.b16 %v277
    %v1159 = vunpack.c.h.b16 %v277
    %v1160 = vunpack.c.l.b16 %v278
    %v1161 = vunpack.c.h.b16 %v278
    %v1162 = vunpack.c.l.b16 %v279
    %v1163 = vunpack.c.h.b16 %v279
    %v1164 = vunpack.c.l.b16 %v280
    %v1165 = vunpack.c.h.b16 %v280
    %v1166 = vunpack.c.l.b16 %v281
    %v1167 = vunpack.c.h.b16 %v281
    %v1168 = vunpack.c.l.b16 %v282
    %v1169 = vunpack.c.h.b16 %v282
    %v1170 = vunpack.c.l.b16 %v283
    %v1171 = vunpack.c.h.b16 %v283
    %v1172 = vunpack.c.l.b16 %v284
    %v1173 = vunpack.c.h.b16 %v284
    %v1174 = vunpack.c.l.b16 %v285
    %v1175 = vunpack.c.h.b16 %v285
    %v1176 = vunpack.c.l.b16 %v286
    %v1177 = vunpack.c.h.b16 %v286
    %v1178 = vunpack.c.l.b16 %v287
    %v1179 = vunpack.c.h.b16 %v287
    %v1180 = vunpack.c.l.b16 %v288
    %v1181 = vunpack.c.h.b16 %v288
    %v1182 = vunpack.c.l.b16 %v289
    %v1183 = vunpack.c.h.b16 %v289
    %v1184 = vunpack.c.l.b16 %v290
    %v1185 = vunpack.c.h.b16 %v290
    %v1186 = vunpack.c.l.b16 %v291
    %v1187 = vunpack.c.h.b16 %v291
    %v1188 = vunpack.c.l.b16 %v292
    %v1189 = vunpack.c.h.b16 %v292
    %v1190 = vunpack.c.l.b16 %v293
    %v1191 = vunpack.c.h.b16 %v293
    %v1192 = vunpack.c.l.b16 %v294
    %v1193 = vunpack.c.h.b16 %v294
    %v1194 = vunpack.c.l.b16 %v295
    %v1195 = vunpack.c.h.b16 %v295
    %v1196 = vunpack.c.l.b16 %v296
    %v1197 = vunpack.c.h.b16 %v296
    %v1198 = vunpack.c.l.b16 %v297
    %v1199 = vunpack.c.h.b16 %v297
    %v1200 = vunpack.c.l.b16 %v298
    %v1201 = vunpack.c.h.b16 %v298
    %v1202 = vunpack.c.l.b16 %v299
    %v1203 = vunpack.c.h.b16 %v299
    %v1204 = vunpack.c.l.b16 %v300
    %v1205 = vunpack.c.h.b16 %v300
    %v1206 = vunpack.c.l.b16 %v301
    %v1207 = vunpack.c.h.b16 %v301
    %v1208 = vunpack.c.l.b16 %v302
    %v1209 = vunpack.c.h.b16 %v302
    %v1210 = vunpack.c.l.b16 %v303
    %v1211 = vunpack.c.h.b16 %v303
    %v1212 = vunpack.c.l.b16 %v304
    %v1213 = vunpack.c.h.b16 %v304
    %v1214 = vunpack.c.l.b16 %v305
    %v1215 = vunpack.c.h.b16 %v305
    %v1216 = vunpack.c.l.b16 %v306
    %v1217 = vunpack.c.h.b16 %v306
    %v1218 = vunpack.c.l.b16 %v307
    %v1219 = vunpack.c.h.b16 %v307
    %v1220 = vunpack.c.l.b16 %v308
    %v1221 = vunpack.c.h.b16 %v308
    %v1222 = vunpack.c.l.b16 %v309
    %v1223 = vunpack.c.h.b16 %v309
    %v1224 = vunpack.c.l.b16 %v310
    %v1225 = vunpack.c.h.b16 %v310
    %v1226 = vunpack.c.l.b16 %v311
    %v1227 = vunpack.c.h.b16 %v311
    %v1228 = vunpack.c.l.b16 %v312
    %v1229 = vunpack.c.h.b16 %v312
    %v1230 = vunpack.c.l.b16 %v313
    %v1231 = vunpack.c.h.b16 %v313
    %v1232 = vunpack.c.l.b16 %v314
    %v1233 = vunpack.c.h.b16 %v314
    %v1234 = vunpack.c.l.b16 %v315
    %v1235 = vunpack.c.h.b16 %v315
    %v1236 = vunpack.c.l.b16 %v316
    %v1237 = vunpack.c.h.b16 %v316
    %v1238 = vunpack.c.l.b16 %v317
    %v1239 = vunpack.c.h.b16 %v317
    %v1240 = vunpack.c.l.b16 %v318
    %v1241 = vunpack.c.h.b16 %v318
    %v1242 = vunpack.c.l.b16 %v319
    %v1243 = vunpack.c.h.b16 %v319
    %v1244 = vunpack.c.l.b16 %v320
    %v1245 = vunpack.c.h.b16 %v320
    %v1246 = vunpack.c.l.b16 %v321
    %v1247 = vunpack.c.h.b16 %v321
    %v1248 = vunpack.c.l.b16 %v322
    %v1249 = vunpack.c.h.b16 %v322
    %v1250 = vunpack.c.l.b16 %v323
    %v1251 = vunpack.c.h.b16 %v323
    %v1252 = vunpack.c.l.b16 %v324
    %v1253 = vunpack.c.h.b16 %v324
    %v1254 = vunpack.c.l.b16 %v325
    %v1255 = vunpack.c.h.b16 %v325
    %v1256 = vunpack.c.l.b16 %v326
    %v1257 = vunpack.c.h.b16 %v326
    %v1258 = vunpack.c.l.b16 %v327
    %v1259 = vunpack.c.h.b16 %v327
    %v1260 = vunpack.c.l.b16 %v328
    %v1261 = vunpack.c.h.b16 %v328
    %v1262 = vunpack.c.l.b16 %v329
    %v1263 = vunpack.c.h.b16 %v329
    %v1264 = vunpack.c.l.b16 %v330
    %v1265 = vunpack.c.h.b16 %v330
    %v1266 = vunpack.c.l.b16 %v331
    %v1267 = vunpack.c.h.b16 %v331
    %v1268 = vunpack.c.l.b16 %v332
    %v1269 = vunpack.c.h.b16 %v332
    %v1270 = vunpack.c.l.b16 %v333
    %v1271 = vunpack.c.h.b16 %v333
    %v1272 = vunpack.c.l.b16 %v334
    %v1273 = vunpack.c.h.b16 %v334
    %v1274 = vunpack.c.l.b16 %v335
    %v1275 = vunpack.c.h.b16 %v335
    %v1276 = vunpack.c.l.b16 %v336
    %v1277 = vunpack.c.h.b16 %v336
    %v1278 = vunpack.c.l.b16 %v337
    %v1279 = vunpack.c.h.b16 %v337
    %v1280 = vunpack.c.l.b16 %v338
    %v1281 = vunpack.c.h.b16 %v338
    %v1282 = vunpack.c.l.b16 %v339
    %v1283 = vunpack.c.h.b16 %v339
    %v1284 = vunpack.c.l.b16 %v340
    %v1285 = vunpack.c.h.b16 %v340
    %v1286 = vunpack.c.l.b16 %v341
    %v1287 = vunpack.c.h.b16 %v341
    %v1288 = vunpack.c.l.b16 %v342
    %v1289 = vunpack.c.h.b16 %v342
    %v1290 = vunpack.c.l.b16 %v343
    %v1291 = vunpack.c.h.b16 %v343
    %v1292 = vunpack.c.l.b16 %v344
    %v1293 = vunpack.c.h.b16 %v344
    %v1294 = vunpack.c.l.b16 %v345
    %v1295 = vunpack.c.h.b16 %v345
    %v1296 = vunpack.c.l.b16 %v346
    %v1297 = vunpack.c.h.b16 %v346
    %v1298 = vunpack.c.l.b16 %v347
    %v1299 = vunpack.c.h.b16 %v347
    %v1300 = vunpack.c.l.b16 %v348
    %v1301 = vunpack.c.h.b16 %v348
    %v1302 = vunpack.c.l.b16 %v349
    %v1303 = vunpack.c.h.b16 %v349
    %v1304 = vunpack.c.l.b16 %v350
    %v1305 = vunpack.c.h.b16 %v350
    %v1306 = vunpack.c.l.b16 %v351
    %v1307 = vunpack.c.h.b16 %v351
    %v1308 = vunpack.c.l.b16 %v352
    %v1309 = vunpack.c.h.b16 %v352
    %v1310 = vunpack.c.l.b16 %v353
    %v1311 = vunpack.c.h.b16 %v353
    %v1312 = vunpack.c.l.b16 %v354
    %v1313 = vunpack.c.h.b16 %v354
    %v1314 = vunpack.c.l.b16 %v355
    %v1315 = vunpack.c.h.b16 %v355
    %v1316 = vunpack.c.l.b16 %v356
    %v1317 = vunpack.c.h.b16 %v356
    %v1318 = vunpack.c.l.b16 %v357
    %v1319 = vunpack.c.h.b16 %v357
    %v1320 = vunpack.c.l.b16 %v358
    %v1321 = vunpack.c.h.b16 %v358
    %v1322 = vunpack.c.l.b16 %v359
    %v1323 = vunpack.c.h.b16 %v359
    %v1324 = vunpack.c.l.b16 %v360
    %v1325 = vunpack.c.h.b16 %v360
    %v1326 = vunpack.c.l.b16 %v361
    %v1327 = vunpack.c.h.b16 %v361
    %v1328 = vunpack.c.l.b16 %v362
    %v1329 = vunpack.c.h.b16 %v362
    %v1330 = vunpack.c.l.b16 %v363
    %v1331 = vunpack.c.h.b16 %v363
    %v1332 = vunpack.c.l.b16 %v364
    %v1333 = vunpack.c.h.b16 %v364
    %v1334 = vunpack.c.l.b16 %v365
    %v1335 = vunpack.c.h.b16 %v365
    %v1336 = vunpack.c.l.b16 %v366
    %v1337 = vunpack.c.h.b16 %v366
    %v1338 = vunpack.c.l.b16 %v367
    %v1339 = vunpack.c.h.b16 %v367
    %v1340 = vunpack.c.l.b16 %v368
    %v1341 = vunpack.c.h.b16 %v368
    %v1342 = vunpack.c.l.b16 %v369
    %v1343 = vunpack.c.h.b16 %v369
    %v1344 = vunpack.c.l.b16 %v370
    %v1345 = vunpack.c.h.b16 %v370
    %v1346 = vunpack.c.l.b16 %v371
    %v1347 = vunpack.c.h.b16 %v371
    %v1348 = vunpack.c.l.b16 %v372
    %v1349 = vunpack.c.h.b16 %v372
    %v1350 = vunpack.c.l.b16 %v373
    %v1351 = vunpack.c.h.b16 %v373
    %v1352 = vunpack.c.l.b16 %v374
    %v1353 = vunpack.c.h.b16 %v374
    %v1354 = vunpack.c.l.b16 %v375
    %v1355 = vunpack.c.h.b16 %v375
    %v1356 = vunpack.c.l.b16 %v376
    %v1357 = vunpack.c.h.b16 %v376
    %v1358 = vunpack.c.l.b16 %v377
    %v1359 = vunpack.c.h.b16 %v377
    %v1360 = vunpack.c.l.b16 %v378
    %v1361 = vunpack.c.h.b16 %v378
    %v1362 = vunpack.c.l.b16 %v379
    %v1363 = vunpack.c.h.b16 %v379
    %v1364 = vunpack.c.l.b16 %v380
    %v1365 = vunpack.c.h.b16 %v380
    %v1366 = vunpack.c.l.b16 %v381
    %v1367 = vunpack.c.h.b16 %v381
    %v1368 = vunpack.c.l.b16 %v382
    %v1369 = vunpack.c.h.b16 %v382
    %v1370 = vunpack.c.l.b16 %v383
    %v1371 = vunpack.c.h.b16 %v383
    %v1372 = vunpack.c.l.b16 %v384
    %v1373 = vunpack.c.h.b16 %v384
    %v1374 = vunpack.c.l.b16 %v385
    %v1375 = vunpack.c.h.b16 %v385
    %v1376 = vunpack.c.l.b16 %v386
    %v1377 = vunpack.c.h.b16 %v386
    %v1378 = vunpack.c.l.b16 %v387
    %v1379 = vunpack.c.h.b16 %v387
    %v1380 = vunpack.c.l.b16 %v388
    %v1381 = vunpack.c.h.b16 %v388
    %v1382 = vunpack.c.l.b16 %v389
    %v1383 = vunpack.c.h.b16 %v389
    %v1384 = vunpack.c.l.b16 %v390
    %v1385 = vunpack.c.h.b16 %v390
    %v1386 = vunpack.c.l.b16 %v391
    %v1387 = vunpack.c.h.b16 %v391
    %v1388 = vunpack.c.l.b16 %v392
    %v1389 = vunpack.c.h.b16 %v392
    %v1390 = vunpack.c.l.b16 %v393
    %v1391 = vunpack.c.h.b16 %v393
    %v1392 = vunpack.c.l.b16 %v394
    %v1393 = vunpack.c.h.b16 %v394
    %v1394 = vunpack.c.l.b16 %v395
    %v1395 = vunpack.c.h.b16 %v395
    %v1396 = vunpack.c.l.b16 %v396
    %v1397 = vunpack.c.h.b16 %v396
    %v1398 = vunpack.c.l.b16 %v397
    %v1399 = vunpack.c.h.b16 %v397
    %v1400 = vunpack.c.l.b16 %v398
    %v1401 = vunpack.c.h.b16 %v398
    %v1402 = vunpack.c.l.b16 %v399
    %v1403 = vunpack.c.h.b16 %v399
    %v1404 = vunpack.c.l.b16 %v400
    %v1405 = vunpack.c.h.b16 %v400
    %v1406 = vunpack.c.l.b16 %v401
    %v1407 = vunpack.c.h.b16 %v401
    %v1408 = vunpack.c.l.b16 %v402
    %v1409 = vunpack.c.h.b16 %v402
    %v1410 = vunpack.c.l.b16 %v403
    %v1411 = vunpack.c.h.b16 %v403
    %v1412 = vunpack.c.l.b16 %v404
    %v1413 = vunpack.c.h.b16 %v404
    %v1414 = vunpack.c.l.b16 %v405
    %v1415 = vunpack.c.h.b16 %v405
    %v1416 = vunpack.c.l.b16 %v406
    %v1417 = vunpack.c.h.b16 %v406
    %v1418 = vunpack.c.l.b16 %v407
    %v1419 = vunpack.c.h.b16 %v407
    %v1420 = vunpack.c.l.b16 %v408
    %v1421 = vunpack.c.h.b16 %v408
    %v1422 = vunpack.c.l.b16 %v409
    %v1423 = vunpack.c.h.b16 %v409
    %v1424 = vunpack.c.l.b16 %v410
    %v1425 = vunpack.c.h.b16 %v410
    %v1426 = vunpack.c.l.b16 %v411
    %v1427 = vunpack.c.h.b16 %v411
    %v1428 = vunpack.c.l.b16 %v412
    %v1429 = vunpack.c.h.b16 %v412
    %v1430 = vunpack.c.l.b16 %v413
    %v1431 = vunpack.c.h.b16 %v413
    %v1432 = vunpack.c.l.b16 %v414
    %v1433 = vunpack.c.h.b16 %v414
    %v1434 = vunpack.c.l.b16 %v415
    %v1435 = vunpack.c.h.b16 %v415
    %v1436 = vunpack.c.l.b16 %v416
    %v1437 = vunpack.c.h.b16 %v416
    %v1438 = vunpack.c.l.b16 %v417
    %v1439 = vunpack.c.h.b16 %v417
    %v1440 = vunpack.c.l.b16 %v418
    %v1441 = vunpack.c.h.b16 %v418
    %v1442 = vunpack.c.l.b16 %v419
    %v1443 = vunpack.c.h.b16 %v419
    %v1444 = vunpack.c.l.b16 %v420
    %v1445 = vunpack.c.h.b16 %v420
    %v1446 = vunpack.c.l.b16 %v421
    %v1447 = vunpack.c.h.b16 %v421
    %v1448 = vunpack.c.l.b16 %v422
    %v1449 = vunpack.c.h.b16 %v422
    %v1450 = vunpack.c.l.b16 %v423
    %v1451 = vunpack.c.h.b16 %v423
    %v1452 = vunpack.c.l.b16 %v424
    %v1453 = vunpack.c.h.b16 %v424
    %v1454 = vunpack.c.l.b16 %v425
    %v1455 = vunpack.c.h.b16 %v425
    %v1456 = vunpack.c.l.b16 %v426
    %v1457 = vunpack.c.h.b16 %v426
    %v1458 = vunpack.c.l.b16 %v427
    %v1459 = vunpack.c.h.b16 %v427
    %v1460 = vunpack.c.l.b16 %v428
    %v1461 = vunpack.c.h.b16 %v428
    %v1462 = vunpack.c.l.b16 %v429
    %v1463 = vunpack.c.h.b16 %v429
    %v1464 = vunpack.c.l.b16 %v430
    %v1465 = vunpack.c.h.b16 %v430
    %v1466 = vunpack.c.l.b16 %v431
    %v1467 = vunpack.c.h.b16 %v431
    %v1468 = vunpack.c.l.b16 %v432
    %v1469 = vunpack.c.h.b16 %v432
    %v1470 = vunpack.c.l.b16 %v433
    %v1471 = vunpack.c.h.b16 %v433
    %v1472 = vunpack.c.l.b16 %v434
    %v1473 = vunpack.c.h.b16 %v434
    %v1474 = vunpack.c.l.b16 %v435
    %v1475 = vunpack.c.h.b16 %v435
    %v1476 = vunpack.c.l.b16 %v436
    %v1477 = vunpack.c.h.b16 %v436
    %v1478 = vunpack.c.l.b16 %v437
    %v1479 = vunpack.c.h.b16 %v437
    %v1480 = vunpack.c.l.b16 %v438
    %v1481 = vunpack.c.h.b16 %v438
    %v1482 = vunpack.c.l.b16 %v439
    %v1483 = vunpack.c.h.b16 %v439
    %v1484 = vunpack.c.l.b16 %v440
    %v1485 = vunpack.c.h.b16 %v440
    %v1486 = vunpack.c.l.b16 %v441
    %v1487 = vunpack.c.h.b16 %v441
    %v1488 = vunpack.c.l.b16 %v442
    %v1489 = vunpack.c.h.b16 %v442
    %v1490 = vunpack.c.l.b16 %v443
    %v1491 = vunpack.c.h.b16 %v443
    %v1492 = vunpack.c.l.b16 %v444
    %v1493 = vunpack.c.h.b16 %v444
    %v1494 = vunpack.c.l.b16 %v445
    %v1495 = vunpack.c.h.b16 %v445
    %v1496 = vunpack.c.l.b16 %v446
    %v1497 = vunpack.c.h.b16 %v446
    %v1498 = vunpack.c.l.b16 %v447
    %v1499 = vunpack.c.h.b16 %v447
    %v1500 = vunpack.c.l.b16 %v448
    %v1501 = vunpack.c.h.b16 %v448
    %v1502 = vunpack.c.l.b16 %v449
    %v1503 = vunpack.c.h.b16 %v449
    %v1504 = vunpack.c.l.b16 %v450
    %v1505 = vunpack.c.h.b16 %v450
    %v1506 = vunpack.c.l.b16 %v451
    %v1507 = vunpack.c.h.b16 %v451
    %v1508 = vunpack.c.l.b16 %v452
    %v1509 = vunpack.c.h.b16 %v452
    %v1510 = vunpack.c.l.b16 %v453
    %v1511 = vunpack.c.h.b16 %v453
    %v1512 = vunpack.c.l.b16 %v454
    %v1513 = vunpack.c.h.b16 %v454
    %v1514 = vunpack.c.l.b16 %v455
    %v1515 = vunpack.c.h.b16 %v455
    %v1516 = vunpack.c.l.b16 %v456
    %v1517 = vunpack.c.h.b16 %v456
    %v1518 = vunpack.c.l.b16 %v457
    %v1519 = vunpack.c.h.b16 %v457
    %v1520 = vunpack.c.l.b16 %v458
    %v1521 = vunpack.c.h.b16 %v458
    %v1522 = vunpack.c.l.b16 %v459
    %v1523 = vunpack.c.h.b16 %v459
    %v1524 = vunpack.c.l.b16 %v460
    %v1525 = vunpack.c.h.b16 %v460
    %v1526 = vunpack.c.l.b16 %v461
    %v1527 = vunpack.c.h.b16 %v461
    %v1528 = vunpack.c.l.b16 %v462
    %v1529 = vunpack.c.h.b16 %v462
    %v1530 = vunpack.c.l.b16 %v463
    %v1531 = vunpack.c.h.b16 %v463
    %v1532 = vunpack.c.l.b16 %v464
    %v1533 = vunpack.c.h.b16 %v464
    %v1534 = vunpack.c.l.b16 %v465
    %v1535 = vunpack.c.h.b16 %v465
    %v1536 = vunpack.c.l.b16 %v466
    %v1537 = vunpack.c.h.b16 %v466
    %v1538 = vunpack.c.l.b16 %v467
    %v1539 = vunpack.c.h.b16 %v467
    %v1540 = vunpack.c.l.b16 %v468
    %v1541 = vunpack.c.h.b16 %v468
    %v1542 = vunpack.c.l.b16 %v469
    %v1543 = vunpack.c.h.b16 %v469
    %v1544 = vunpack.c.l.b16 %v470
    %v1545 = vunpack.c.h.b16 %v470
    %v1546 = vunpack.c.l.b16 %v471
    %v1547 = vunpack.c.h.b16 %v471
    %v1548 = vunpack.c.l.b16 %v472
    %v1549 = vunpack.c.h.b16 %v472
    %v1550 = vunpack.c.l.b16 %v473
    %v1551 = vunpack.c.h.b16 %v473
    %v1552 = vunpack.c.l.b16 %v474
    %v1553 = vunpack.c.h.b16 %v474
    %v1554 = vunpack.c.l.b16 %v475
    %v1555 = vunpack.c.h.b16 %v475
    %v1556 = vunpack.c.l.b16 %v476
    %v1557 = vunpack.c.h.b16 %v476
    %v1558 = vunpack.c.l.b16 %v477
    %v1559 = vunpack.c.h.b16 %v477
    %v1560 = vunpack.c.l.b16 %v478
    %v1561 = vunpack.c.h.b16 %v478
    %v1562 = vunpack.c.l.b16 %v479
    %v1563 = vunpack.c.h.b16 %v479
    %v1564 = vunpack.c.l.b16 %v480
    %v1565 = vunpack.c.h.b16 %v480
    %v1566 = vunpack.c.l.b16 %v481
    %v1567 = vunpack.c.h.b16 %v481
    %v1568 = vunpack.c.l.b16 %v482
    %v1569 = vunpack.c.h.b16 %v482
    %v1570 = vunpack.c.l.b16 %v483
    %v1571 = vunpack.c.h.b16 %v483
    %v1572 = vunpack.c.l.b16 %v484
    %v1573 = vunpack.c.h.b16 %v484
    %v1574 = vunpack.c.l.b16 %v485
    %v1575 = vunpack.c.h.b16 %v485
    %v1576 = vunpack.c.l.b16 %v486
    %v1577 = vunpack.c.h.b16 %v486
    %v1578 = vunpack.c.l.b16 %v487
    %v1579 = vunpack.c.h.b16 %v487
    %v1580 = vunpack.c.l.b16 %v488
    %v1581 = vunpack.c.h.b16 %v488
    %v1582 = vunpack.c.l.b16 %v489
    %v1583 = vunpack.c.h.b16 %v489
    %v1584 = vunpack.c.l.b16 %v490
    %v1585 = vunpack.c.h.b16 %v490
    %v1586 = vunpack.c.l.b16 %v491
    %v1587 = vunpack.c.h.b16 %v491
    %v1588 = vunpack.c.l.b16 %v492
    %v1589 = vunpack.c.h.b16 %v492
    %v1590 = vunpack.c.l.b16 %v493
    %v1591 = vunpack.c.h.b16 %v493
    %v1592 = vunpack.c.l.b16 %v494
    %v1593 = vunpack.c.h.b16 %v494
    %v1594 = vunpack.c.l.b16 %v495
    %v1595 = vunpack.c.h.b16 %v495
    %v1596 = vunpack.c.l.b16 %v496
    %v1597 = vunpack.c.h.b16 %v496
    %v1598 = vunpack.c.l.b16 %v497
    %v1599 = vunpack.c.h.b16 %v497
    %v1600 = vunpack.c.l.b16 %v498
    %v1601 = vunpack.c.h.b16 %v498
    %v1602 = vunpack.c.l.b16 %v499
    %v1603 = vunpack.c.h.b16 %v499
    %v1604 = vunpack.c.l.b16 %v500
    %v1605 = vunpack.c.h.b16 %v500
    %v1606 = vunpack.c.l.b16 %v501
    %v1607 = vunpack.c.h.b16 %v501
    %v1608 = vunpack.c.l.b16 %v502
    %v1609 = vunpack.c.h.b16 %v502
    %v1610 = vunpack.c.l.b16 %v503
    %v1611 = vunpack.c.h.b16 %v503
    %v1612 = vunpack.c.l.b16 %v504
    %v1613 = vunpack.c.h.b16 %v504
    %v1614 = vunpack.c.l.b16 %v505
    %v1615 = vunpack.c.h.b16 %v505
    %v1616 = vunpack.c.l.b16 %v506
    %v1617 = vunpack.c.h.b16 %v506
    %v1618 = vunpack.c.l.b16 %v507
    %v1619 = vunpack.c.h.b16 %v507
    %v1620 = vunpack.c.l.b16 %v508
    %v1621 = vunpack.c.h.b16 %v508
    %v1622 = vunpack.c.l.b16 %v509
    %v1623 = vunpack.c.h.b16 %v509
    %v1624 = vunpack.c.l.b16 %v510
    %v1625 = vunpack.c.h.b16 %v510
    %v1626 = vunpack.c.l.b16 %v511
    %v1627 = vunpack.c.h.b16 %v511
    %v1628 = vunpack.c.l.b16 %v512
    %v1629 = vunpack.c.h.b16 %v512
    %v1630 = vunpack.c.l.b16 %v513
    %v1631 = vunpack.c.h.b16 %v513
    %v1632 = vunpack.c.l.b16 %v514
    %v1633 = vunpack.c.h.b16 %v514
    %v1634 = vunpack.c.l.b16 %v515
    %v1635 = vunpack.c.h.b16 %v515
    %v1636 = vunpack.c.l.b16 %v516
    %v1637 = vunpack.c.h.b16 %v516
    %v1638 = vunpack.c.l.b16 %v517
    %v1639 = vunpack.c.h.b16 %v517
    %v1640 = vunpack.c.l.b16 %v518
    %v1641 = vunpack.c.h.b16 %v518
    %v1642 = vunpack.c.l.b16 %v519
    %v1643 = vunpack.c.h.b16 %v519
    %v1644 = vunpack.c.l.b16 %v520
    %v1645 = vunpack.c.h.b16 %v520
    %v1646 = vunpack.c.l.b16 %v521
    %v1647 = vunpack.c.h.b16 %v521
    %v1648 = vunpack.c.l.b16 %v522
    %v1649 = vunpack.c.h.b16 %v522
    %v1650 = vunpack.c.l.b16 %v523
    %v1651 = vunpack.c.h.b16 %v523
    %v1652 = vunpack.c.l.b16 %v524
    %v1653 = vunpack.c.h.b16 %v524
    %v1654 = vunpack.c.l.b16 %v525
    %v1655 = vunpack.c.h.b16 %v525
    %v1656 = vunpack.c.l.b16 %v526
    %v1657 = vunpack.c.h.b16 %v526
    %v1658 = vunpack.c.l.b16 %v527
    %v1659 = vunpack.c.h.b16 %v527
    %v1660 = vunpack.c.l.b16 %v528
    %v1661 = vunpack.c.h.b16 %v528
    %v1662 = vunpack.c.l.b16 %v529
    %v1663 = vunpack.c.h.b16 %v529
    %v1664 = vunpack.c.l.b16 %v530
    %v1665 = vunpack.c.h.b16 %v530
    %v1666 = vunpack.c.l.b16 %v531
    %v1667 = vunpack.c.h.b16 %v531
    %v1668 = vunpack.c.l.b16 %v532
    %v1669 = vunpack.c.h.b16 %v532
    %v1670 = vunpack.c.l.b16 %v533
    %v1671 = vunpack.c.h.b16 %v533
    %v1672 = vunpack.c.l.b16 %v534
    %v1673 = vunpack.c.h.b16 %v534
    %v1674 = vunpack.c.l.b16 %v535
    %v1675 = vunpack.c.h.b16 %v535
    %v1676 = vunpack.c.l.b16 %v536
    %v1677 = vunpack.c.h.b16 %v536
    %v1678 = vunpack.c.l.b16 %v537
    %v1679 = vunpack.c.h.b16 %v537
    %v1680 = vunpack.c.l.b16 %v538
    %v1681 = vunpack.c.h.b16 %v538
    %v1682 = vunpack.c.l.b16 %v539
    %v1683 = vunpack.c.h.b16 %v539
    %v1684 = vunpack.c.l.b16 %v540
    %v1685 = vunpack.c.h.b16 %v540
    %v1686 = vunpack.c.l.b16 %v541
    %v1687 = vunpack.c.h.b16 %v541
    %v1688 = vunpack.c.l.b16 %v542
    %v1689 = vunpack.c.h.b16 %v542
    %v1690 = vunpack.c.l.b16 %v543
    %v1691 = vunpack.c.h.b16 %v543
    %v1692 = vunpack.c.l.b16 %v544
    %v1693 = vunpack.c.h.b16 %v544
    %v1694 = vunpack.c.l.b16 %v545
    %v1695 = vunpack.c.h.b16 %v545
    %v1696 = vunpack.c.l.b16 %v546
    %v1697 = vunpack.c.h.b16 %v546
    %v1698 = vunpack.c.l.b16 %v547
    %v1699 = vunpack.c.h.b16 %v547
    %v1700 = vunpack.c.l.b16 %v548
    %v1701 = vunpack.c.h.b16 %v548
    %v1702 = vunpack.c.l.b16 %v549
    %v1703 = vunpack.c.h.b16 %v549
    %v1704 = vunpack.c.l.b16 %v550
    %v1705 = vunpack.c.h.b16 %v550
    %v1706 = vunpack.c.l.b16 %v551
    %v1707 = vunpack.c.h.b16 %v551
    %v1708 = vunpack.c.l.b16 %v552
    %v1709 = vunpack.c.h.b16 %v552
    %v1710 = vunpack.c.l.b16 %v553
    %v1711 = vunpack.c.h.b16 %v553
    %v1712 = vunpack.c.l.b16 %v554
    %v1713 = vunpack.c.h.b16 %v554
    %v1714 = vunpack.c.l.b16 %v555
    %v1715 = vunpack.c.h.b16 %v555
    %v1716 = vunpack.c.l.b16 %v556
    %v1717 = vunpack.c.h.b16 %v556
    %v1718 = vunpack.c.l.b16 %v557
    %v1719 = vunpack.c.h.b16 %v557
    %v1720 = vpack.c.b16 %v956, %v952
    %v1721 = vpack.c.b16 %v957, %v953
    %v1722 = vpack.c.b16 %v958, %v954
    %v1723 = vpack.c.b16 %v959, %v955
    %v1724 = vpack.c.b16 %v964, %v960
    %v1725 = vpack.c.b16 %v965, %v961
    %v1726 = vpack.c.b16 %v966, %v962
    %v1727 = vpack.c.b16 %v967, %v963
    %v1728 = vpack.c.b16 %v972, %v968
    %v1729 = vpack.c.b16 %v973, %v969
    %v1730 = vpack.c.b16 %v974, %v970
    %v1731 = vpack.c.b16 %v975, %v971
    %v1732 = vpack.c.b16 %v980, %v976
    %v1733 = vpack.c.b16 %v981, %v977
    %v1734 = vpack.c.b16 %v982, %v978
    %v1735 = vpack.c.b16 %v983, %v979
    %v1736 = vpack.c.b16 %v988, %v984
    %v1737 = vpack.c.b16 %v989, %v985
    %v1738 = vpack.c.b16 %v990, %v986
    %v1739 = vpack.c.b16 %v991, %v987
    %v1740 = vpack.c.b16 %v996, %v992
    %v1741 = vpack.c.b16 %v997, %v993
    %v1742 = vpack.c.b16 %v998, %v994
    %v1743 = vpack.c.b16 %v999, %v995
    %v1744 = vpack.c.b16 %v1004, %v1000
    %v1745 = vpack.c.b16 %v1005, %v1001
    %v1746 = vpack.c.b16 %v1006, %v1002
    %v1747 = vpack.c.b16 %v1007, %v1003
    %v1748 = vpack.c.b16 %v1012, %v1008
    %v1749 = vpack.c.b16 %v1013, %v1009
    %v1750 = vpack.c.b16 %v1014, %v1010
    %v1751 = vpack.c.b16 %v1015, %v1011
    %v1752 = vpack.c.b16 %v1020, %v1016
    %v1753 = vpack.c.b16 %v1021, %v1017
    %v1754 = vpack.c.b16 %v1022, %v1018
    %v1755 = vpack.c.b16 %v1023, %v1019
    %v1756 = vpack.c.b16 %v1028, %v1024
    %v1757 = vpack.c.b16 %v1029, %v1025
    %v1758 = vpack.c.b16 %v1030, %v1026
    %v1759 = vpack.c.b16 %v1031, %v1027
    %v1760 = vpack.c.b16 %v1036, %v1032
    %v1761 = vpack.c.b16 %v1037, %v1033
    %v1762 = vpack.c.b16 %v1038, %v1034
    %v1763 = vpack.c.b16 %v1039, %v1035
    %v1764 = vpack.c.b16 %v1044, %v1040
    %v1765 = vpack.c.b16 %v1045, %v1041
    %v1766 = vpack.c.b16 %v1046, %v1042
    %v1767 = vpack.c.b16 %v1047, %v1043
    %v1768 = vpack.c.b16 %v1052, %v1048
    %v1769 = vpack.c.b16 %v1053, %v1049
    %v1770 = vpack.c.b16 %v1054, %v1050
    %v1771 = vpack.c.b16 %v1055, %v1051
    %v1772 = vpack.c.b16 %v1060, %v1056
    %v1773 = vpack.c.b16 %v1061, %v1057
    %v1774 = vpack.c.b16 %v1062, %v1058
    %v1775 = vpack.c.b16 %v1063, %v1059
    %v1776 = vpack.c.b16 %v1068, %v1064
    %v1777 = vpack.c.b16 %v1069, %v1065
    %v1778 = vpack.c.b16 %v1070, %v1066
    %v1779 = vpack.c.b16 %v1071, %v1067
    %v1780 = vpack.c.b16 %v1076, %v1072
    %v1781 = vpack.c.b16 %v1077, %v1073
    %v1782 = vpack.c.b16 %v1078, %v1074
    %v1783 = vpack.c.b16 %v1079, %v1075
    %v1784 = vpack.c.b16 %v1084, %v1080
    %v1785 = vpack.c.b16 %v1085, %v1081
    %v1786 = vpack.c.b16 %v1086, %v1082
    %v1787 = vpack.c.b16 %v1087, %v1083
    %v1788 = vpack.c.b16 %v1092, %v1088
    %v1789 = vpack.c.b16 %v1093, %v1089
    %v1790 = vpack.c.b16 %v1094, %v1090
    %v1791 = vpack.c.b16 %v1095, %v1091
    %v1792 = vpack.c.b16 %v1100, %v1096
    %v1793 = vpack.c.b16 %v1101, %v1097
    %v1794 = vpack.c.b16 %v1102, %v1098
    %v1795 = vpack.c.b16 %v1103, %v1099
    %v1796 = vpack.c.b16 %v1108, %v1104
    %v1797 = vpack.c.b16 %v1109, %v1105
    %v1798 = vpack.c.b16 %v1110, %v1106
    %v1799 = vpack.c.b16 %v1111, %v1107
    %v1800 = vpack.c.b16 %v1116, %v1112
    %v1801 = vpack.c.b16 %v1117, %v1113
    %v1802 = vpack.c.b16 %v1118, %v1114
    %v1803 = vpack.c.b16 %v1119, %v1115
    %v1804 = vpack.c.b16 %v1124, %v1120
    %v1805 = vpack.c.b16 %v1125, %v1121
    %v1806 = vpack.c.b16 %v1126, %v1122
    %v1807 = vpack.c.b16 %v1127, %v1123
    %v1808 = vpack.c.b16 %v1132, %v1128
    %v1809 = vpack.c.b16 %v1133, %v1129
    %v1810 = vpack.c.b16 %v1134, %v1130
    %v1811 = vpack.c.b16 %v1135, %v1131
    %v1812 = vpack.c.b16 %v1140, %v1136
    %v1813 = vpack.c.b16 %v1141, %v1137
    %v1814 = vpack.c.b16 %v1142, %v1138
    %v1815 = vpack.c.b16 %v1143, %v1139
    %v1816 = vpack.c.b16 %v1148, %v1144
    %v1817 = vpack.c.b16 %v1149, %v1145
    %v1818 = vpack.c.b16 %v1150, %v1146
    %v1819 = vpack.c.b16 %v1151, %v1147
    %v1820 = vpack.c.b16 %v1156, %v1152
    %v1821 = vpack.c.b16 %v1157, %v1153
    %v1822 = vpack.c.b16 %v1158, %v1154
    %v1823 = vpack.c.b16 %v1159, %v1155
    %v1824 = vpack.c.b16 %v1164, %v1160
    %v1825 = vpack.c.b16 %v1165, %v1161
    %v1826 = vpack.c.b16 %v1166, %v1162
    %v1827 = vpack.c.b16 %v1167, %v1163
    %v1828 = vpack.c.b16 %v1172, %v1168
    %v1829 = vpack.c.b16 %v1173, %v1169
    %v1830 = vpack.c.b16 %v1174, %v1170
    %v1831 = vpack.c.b16 %v1175, %v1171
    %v1832 = vpack.c.b16 %v1180, %v1176
    %v1833 = vpack.c.b16 %v1181, %v1177
    %v1834 = vpack.c.b16 %v1182, %v1178
    %v1835 = vpack.c.b16 %v1183, %v1179
    %v1836 = vpack.c.b16 %v1188, %v1184
    %v1837 = vpack.c.b16 %v1189, %v1185
    %v1838 = vpack.c.b16 %v1190, %v1186
    %v1839 = vpack.c.b16 %v1191, %v1187
    %v1840 = vpack.c.b16 %v1196, %v1192
    %v1841 = vpack.c.b16 %v1197, %v1193
    %v1842 = vpack.c.b16 %v1198, %v1194
    %v1843 = vpack.c.b16 %v1199, %v1195
    %v1844 = vpack.c.b16 %v1204, %v1200
    %v1845 = vpack.c.b16 %v1205, %v1201
    %v1846 = vpack.c.b16 %v1206, %v1202
    %v1847 = vpack.c.b16 %v1207, %v1203
    %v1848 = vpack.c.b16 %v1212, %v1208
    %v1849 = vpack.c.b16 %v1213, %v1209
    %v1850 = vpack.c.b16 %v1214, %v1210
    %v1851 = vpack.c.b16 %v1215, %v1211
    %v1852 = vpack.c.b16 %v1220, %v1216
    %v1853 = vpack.c.b16 %v1221, %v1217
    %v1854 = vpack.c.b16 %v1222, %v1218
    %v1855 = vpack.c.b16 %v1223, %v1219
    %v1856 = vpack.c.b16 %v1228, %v1224
    %v1857 = vpack.c.b16 %v1229, %v1225
    %v1858 = vpack.c.b16 %v1230, %v1226
    %v1859 = vpack.c.b16 %v1231, %v1227
    %v1860 = vpack.c.b16 %v1236, %v1232
    %v1861 = vpack.c.b16 %v1237, %v1233
    %v1862 = vpack.c.b16 %v1238, %v1234
    %v1863 = vpack.c.b16 %v1239, %v1235
    %v1864 = vpack.c.b16 %v1244, %v1240
    %v1865 = vpack.c.b16 %v1245, %v1241
    %v1866 = vpack.c.b16 %v1246, %v1242
    %v1867 = vpack.c.b16 %v1247, %v1243
    %v1868 = vpack.c.b16 %v1252, %v1248
    %v1869 = vpack.c.b16 %v1253, %v1249
    %v1870 = vpack.c.b16 %v1254, %v1250
    %v1871 = vpack.c.b16 %v1255, %v1251
    %v1872 = vpack.c.b16 %v1260, %v1256
    %v1873 = vpack.c.b16 %v1261, %v1257
    %v1874 = vpack.c.b16 %v1262, %v1258
    %v1875 = vpack.c.b16 %v1263, %v1259
    %v1876 = vpack.c.b16 %v1268, %v1264
    %v1877 = vpack.c.b16 %v1269, %v1265
    %v1878 = vpack.c.b16 %v1270, %v1266
    %v1879 = vpack.c.b16 %v1271, %v1267
    %v1880 = vpack.c.b16 %v1276, %v1272
    %v1881 = vpack.c.b16 %v1277, %v1273
    %v1882 = vpack.c.b16 %v1278, %v1274
    %v1883 = vpack.c.b16 %v1279, %v1275
    %v1884 = vpack.c.b16 %v1284, %v1280
    %v1885 = vpack.c.b16 %v1285, %v1281
    %v1886 = vpack.c.b16 %v1286, %v1282
    %v1887 = vpack.c.b16 %v1287, %v1283
    %v1888 = vpack.c.b16 %v1292, %v1288
    %v1889 = vpack.c.b16 %v1293, %v1289
    %v1890 = vpack.c.b16 %v1294, %v1290
    %v1891 = vpack.c.b16 %v1295, %v1291
    %v1892 = vpack.c.b16 %v1300, %v1296
    %v1893 = vpack.c.b16 %v1301, %v1297
    %v1894 = vpack.c.b16 %v1302, %v1298
    %v1895 = vpack.c.b16 %v1303, %v1299
    %v1896 = vpack.c.b16 %v1308, %v1304
    %v1897 = vpack.c.b16 %v1309, %v1305
    %v1898 = vpack.c.b16 %v1310, %v1306
    %v1899 = vpack.c.b16 %v1311, %v1307
    %v1900 = vpack.c.b16 %v1316, %v1312
    %v1901 = vpack.c.b16 %v1317, %v1313
    %v1902 = vpack.c.b16 %v1318, %v1314
    %v1903 = vpack.c.b16 %v1319, %v1315
    %v1904 = vpack.c.b16 %v1324, %v1320
    %v1905 = vpack.c.b16 %v1325, %v1321
    %v1906 = vpack.c.b16 %v1326, %v1322
    %v1907 = vpack.c.b16 %v1327, %v1323
    %v1908 = vpack.c.b16 %v1332, %v1328
    %v1909 = vpack.c.b16 %v1333, %v1329
    %v1910 = vpack.c.b16 %v1334, %v1330
    %v1911 = vpack.c.b16 %v1335, %v1331
    %v1912 = vpack.c.b16 %v1340, %v1336
    %v1913 = vpack.c.b16 %v1341, %v1337
    %v1914 = vpack.c.b16 %v1342, %v1338
    %v1915 = vpack.c.b16 %v1343, %v1339
    %v1916 = vpack.c.b16 %v1348, %v1344
    %v1917 = vpack.c.b16 %v1349, %v1345
    %v1918 = vpack.c.b16 %v1350, %v1346
    %v1919 = vpack.c.b16 %v1351, %v1347
    %v1920 = vpack.c.b16 %v1356, %v1352
    %v1921 = vpack.c.b16 %v1357, %v1353
    %v1922 = vpack.c.b16 %v1358, %v1354
    %v1923 = vpack.c.b16 %v1359, %v1355
    %v1924 = vpack.c.b16 %v1364, %v1360
    %v1925 = vpack.c.b16 %v1365, %v1361
    %v1926 = vpack.c.b16 %v1366, %v1362
    %v1927 = vpack.c.b16 %v1367, %v1363
    %v1928 = vpack.c.b16 %v1372, %v1368
    %v1929 = vpack.c.b16 %v1373, %v1369
    %v1930 = vpack.c.b16 %v1374, %v1370
    %v1931 = vpack.c.b16 %v1375, %v1371
    %v1932 = vpack.c.b16 %v1380, %v1376
    %v1933 = vpack.c.b16 %v1381, %v1377
    %v1934 = vpack.c.b16 %v1382, %v1378
    %v1935 = vpack.c.b16 %v1383, %v1379
    %v1936 = vpack.c.b16 %v1388, %v1384
    %v1937 = vpack.c.b16 %v1389, %v1385
    %v1938 = vpack.c.b16 %v1390, %v1386
    %v1939 = vpack.c.b16 %v1391, %v1387
    %v1940 = vpack.c.b16 %v1396, %v1392
    %v1941 = vpack.c.b16 %v1397, %v1393
    %v1942 = vpack.c.b16 %v1398, %v1394
    %v1943 = vpack.c.b16 %v1399, %v1395
    %v1944 = vpack.c.b16 %v1404, %v1400
    %v1945 = vpack.c.b16 %v1405, %v1401
    %v1946 = vpack.c.b16 %v1406, %v1402
    %v1947 = vpack.c.b16 %v1407, %v1403
    %v1948 = vpack.c.b16 %v1412, %v1408
    %v1949 = vpack.c.b16 %v1413, %v1409
    %v1950 = vpack.c.b16 %v1414, %v1410
    %v1951 = vpack.c.b16 %v1415, %v1411
    %v1952 = vpack.c.b16 %v1420, %v1416
    %v1953 = vpack.c.b16 %v1421, %v1417
    %v1954 = vpack.c.b16 %v1422, %v1418
    %v1955 = vpack.c.b16 %v1423, %v1419
    %v1956 = vpack.c.b16 %v1428, %v1424
    %v1957 = vpack.c.b16 %v1429, %v1425
    %v1958 = vpack.c.b16 %v1430, %v1426
    %v1959 = vpack.c.b16 %v1431, %v1427
    %v1960 = vpack.c.b16 %v1436, %v1432
    %v1961 = vpack.c.b16 %v1437, %v1433
    %v1962 = vpack.c.b16 %v1438, %v1434
    %v1963 = vpack.c.b16 %v1439, %v1435
    %v1964 = vpack.c.b16 %v1444, %v1440
    %v1965 = vpack.c.b16 %v1445, %v1441
    %v1966 = vpack.c.b16 %v1446, %v1442
    %v1967 = vpack.c.b16 %v1447, %v1443
    %v1968 = vpack.c.b16 %v1452, %v1448
    %v1969 = vpack.c.b16 %v1453, %v1449
    %v1970 = vpack.c.b16 %v1454, %v1450
    %v1971 = vpack.c.b16 %v1455, %v1451
    %v1972 = vpack.c.b16 %v1460, %v1456
    %v1973 = vpack.c.b16 %v1461, %v1457
    %v1974 = vpack.c.b16 %v1462, %v1458
    %v1975 = vpack.c.b16 %v1463, %v1459
    %v1976 = vpack.c.b16 %v1468, %v1464
    %v1977 = vpack.c.b16 %v1469, %v1465
    %v1978 = vpack.c.b16 %v1470, %v1466
    %v1979 = vpack.c.b16 %v1471, %v1467
    %v1980 = vpack.c.b16 %v1476, %v1472
    %v1981 = vpack.c.b16 %v1477, %v1473
    %v1982 = vpack.c.b16 %v1478, %v1474
    %v1983 = vpack.c.b16 %v1479, %v1475
    %v1984 = vpack.c.b16 %v1484, %v1480
    %v1985 = vpack.c.b16 %v1485, %v1481
    %v1986 = vpack.c.b16 %v1486, %v1482
    %v1987 = vpack.c.b16 %v1487, %v1483
    %v1988 = vpack.c.b16 %v1492, %v1488
    %v1989 = vpack.c.b16 %v1493, %v1489
    %v1990 = vpack.c.b16 %v1494, %v1490
    %v1991 = vpack.c.b16 %v1495, %v1491
    %v1992 = vpack.c.b16 %v1500, %v1496
    %v1993 = vpack.c.b16 %v1501, %v1497
    %v1994 = vpack.c.b16 %v1502, %v1498
    %v1995 = vpack.c.b16 %v1503, %v1499
    %v1996 = vpack.c.b16 %v1508, %v1504
    %v1997 = vpack.c.b16 %v1509, %v1505
    %v1998 = vpack.c.b16 %v1510, %v1506
    %v1999 = vpack.c.b16 %v1511, %v1507
    %v2000 = vpack.c.b16 %v1516, %v1512
    %v2001 = vpack.c.b16 %v1517, %v1513
    %v2002 = vpack.c.b16 %v1518, %v1514
    %v2003 = vpack.c.b16 %v1519, %v1515
    %v2004 = vpack.c.b16 %v1524, %v1520
    %v2005 = vpack.c.b16 %v1525, %v1521
    %v2006 = vpack.c.b16 %v1526, %v1522
    %v2007 = vpack.c.b16 %v1527, %v1523
    %v2008 = vpack.c.b16 %v1532, %v1528
    %v2009 = vpack.c.b16 %v1533, %v1529
    %v2010 = vpack.c.b16 %v1534, %v1530
    %v2011 = vpack.c.b16 %v1535, %v1531
    %v2012 = vpack.c.b16 %v1540, %v1536
    %v2013 = vpack.c.b16 %v1541, %v1537
    %v2014 = vpack.c.b16 %v1542, %v1538
    %v2015 = vpack.c.b16 %v1543, %v1539
    %v2016 = vpack.c.b16 %v1548, %v1544
    %v2017 = vpack.c.b16 %v1549, %v1545
    %v2018 = vpack.c.b16 %v1550, %v1546
    %v2019 = vpack.c.b16 %v1551, %v1547
    %v2020 = vpack.c.b16 %v1556, %v1552
    %v2021 = vpack.c.b16 %v1557, %v1553
    %v2022 = vpack.c.b16 %v1558, %v1554
    %v2023 = vpack.c.b16 %v1559, %v1555
    %v2024 = vpack.c.b16 %v1564, %v1560
    %v2025 = vpack.c.b16 %v1565, %v1561
    %v2026 = vpack.c.b16 %v1566, %v1562
    %v2027 = vpack.c.b16 %v1567, %v1563
    %v2028 = vpack.c.b16 %v1572, %v1568
    %v2029 = vpack.c.b16 %v1573, %v1569
    %v2030 = vpack.c.b16 %v1574, %v1570
    %v2031 = vpack.c.b16 %v1575, %v1571
    %v2032 = vpack.c.b16 %v1580, %v1576
    %v2033 = vpack.c.b16 %v1581, %v1577
    %v2034 = vpack.c.b16 %v1582, %v1578
    %v2035 = vpack.c.b16 %v1583, %v1579
    %v2036 = vpack.c.b16 %v1588, %v1584
    %v2037 = vpack.c.b16 %v1589, %v1585
    %v2038 = vpack.c.b16 %v1590, %v1586
    %v2039 = vpack.c.b16 %v1591, %v1587
    %v2040 = vpack.c.b16 %v1596, %v1592
    %v2041 = vpack.c.b16 %v1597, %v1593
    %v2042 = vpack.c.b16 %v1598, %v1594
    %v2043 = vpack.c.b16 %v1599, %v1595
    %v2044 = vpack.c.b16 %v1604, %v1600
    %v2045 = vpack.c.b16 %v1605, %v1601
    %v2046 = vpack.c.b16 %v1606, %v1602
    %v2047 = vpack.c.b16 %v1607, %v1603
    %v2048 = vpack.c.b16 %v1612, %v1608
    %v2049 = vpack.c.b16 %v1613, %v1609
    %v2050 = vpack.c.b16 %v1614, %v1610
    %v2051 = vpack.c.b16 %v1615, %v1611
    %v2052 = vpack.c.b16 %v1620, %v1616
    %v2053 = vpack.c.b16 %v1621, %v1617
    %v2054 = vpack.c.b16 %v1622, %v1618
    %v2055 = vpack.c.b16 %v1623, %v1619
    %v2056 = vpack.c.b16 %v1628, %v1624
    %v2057 = vpack.c.b16 %v1629, %v1625
    %v2058 = vpack.c.b16 %v1630, %v1626
    %v2059 = vpack.c.b16 %v1631, %v1627
    %v2060 = vpack.c.b16 %v1636, %v1632
    %v2061 = vpack.c.b16 %v1637, %v1633
    %v2062 = vpack.c.b16 %v1638, %v1634
    %v2063 = vpack.c.b16 %v1639, %v1635
    %v2064 = vpack.c.b16 %v1644, %v1640
    %v2065 = vpack.c.b16 %v1645, %v1641
    %v2066 = vpack.c.b16 %v1646, %v1642
    %v2067 = vpack.c.b16 %v1647, %v1643
    %v2068 = vpack.c.b16 %v1652, %v1648
    %v2069 = vpack.c.b16 %v1653, %v1649
    %v2070 = vpack.c.b16 %v1654, %v1650
    %v2071 = vpack.c.b16 %v1655, %v1651
    %v2072 = vpack.c.b16 %v1660, %v1656
    %v2073 = vpack.c.b16 %v1661, %v1657
    %v2074 = vpack.c.b16 %v1662, %v1658
    %v2075 = vpack.c.b16 %v1663, %v1659
    %v2076 = vpack.c.b16 %v1668, %v1664
    %v2077 = vpack.c.b16 %v1669, %v1665
    %v2078 = vpack.c.b16 %v1670, %v1666
    %v2079 = vpack.c.b16 %v1671, %v1667
    %v2080 = vpack.c.b16 %v1676, %v1672
    %v2081 = vpack.c.b16 %v1677, %v1673
    %v2082 = vpack.c.b16 %v1678, %v1674
    %v2083 = vpack.c.b16 %v1679, %v1675
    %v2084 = vpack.c.b16 %v1684, %v1680
    %v2085 = vpack.c.b16 %v1685, %v1681
    %v2086 = vpack.c.b16 %v1686, %v1682
    %v2087 = vpack.c.b16 %v1687, %v1683
    %v2088 = vpack.c.b16 %v1692, %v1688
    %v2089 = vpack.c.b16 %v1693, %v1689
    %v2090 = vpack.c.b16 %v1694, %v1690
    %v2091 = vpack.c.b16 %v1695, %v1691
    %v2092 = vpack.c.b16 %v1700, %v1696
    %v2093 = vpack.c.b16 %v1701, %v1697
    %v2094 = vpack.c.b16 %v1702, %v1698
    %v2095 = vpack.c.b16 %v1703, %v1699
    %v2096 = vpack.c.b16 %v1708, %v1704
    %v2097 = vpack.c.b16 %v1709, %v1705
    %v2098 = vpack.c.b16 %v1710, %v1706
    %v2099 = vpack.c.b16 %v1711, %v1707
    %v2100 = vpack.c.b16 %v1716, %v1712
    %v2101 = vpack.c.b16 %v1717, %v1713
    %v2102 = vpack.c.b16 %v1718, %v1714
    %v2103 = vpack.c.b16 %v1719, %v1715
    %2488 = vmatpush.bf16.msra.mxu0 %v1748
    %2489 = vmatpush.bf16.msra.mxu0 %v1744
    %2490 = vmatpush.bf16.msra.mxu0 %v1740
    %2491 = vmatpush.bf16.msra.mxu0 %v1736
    %2492 = vmatpush.bf16.msra.mxu0 %v1732
    %2493 = vmatpush.bf16.msra.mxu0 %v1728
    %2494 = vmatpush.bf16.msra.mxu0 %v1724
    %2495 = vmatpush.bf16.msra.mxu0 %v1720
    %2496 = vmatmul.bf16.gmra.mxu0 %v162
    %v2497 = vpop.f32.mrf.mxu0
    %v2498 = vadd.f32 %v560, %v2497
    %v2499 = vpop.f32.mrf.mxu0
    %2500 = vdwg.mxu0
    %2501 = vmatpush.bf16.msra.mxu0 %v1780
    %2502 = vmatpush.bf16.msra.mxu0 %v1776
    %2503 = vmatpush.bf16.msra.mxu0 %v1772
    %2504 = vmatpush.bf16.msra.mxu0 %v1768
    %2505 = vmatpush.bf16.msra.mxu0 %v1764
    %2506 = vmatpush.bf16.msra.mxu0 %v1760
    %2507 = vmatpush.bf16.msra.mxu0 %v1756
    %2508 = vmatpush.bf16.msra.mxu0 %v1752
    %2509 = vmatmul.bf16.gmra.mxu0 %v163
    %v2510 = vpop.f32.mrf.mxu0
    %v2511 = vadd.f32 %v2498, %v2510
    %v2512 = vpop.f32.mrf.mxu0
    %2513 = vdwg.mxu0
    %2514 = vmatpush.bf16.msra.mxu0 %v1812
    %2515 = vmatpush.bf16.msra.mxu0 %v1808
    %2516 = vmatpush.bf16.msra.mxu0 %v1804
    %2517 = vmatpush.bf16.msra.mxu0 %v1800
    %2518 = vmatpush.bf16.msra.mxu0 %v1796
    %2519 = vmatpush.bf16.msra.mxu0 %v1792
    %2520 = vmatpush.bf16.msra.mxu0 %v1788
    %2521 = vmatpush.bf16.msra.mxu0 %v1784
    %2522 = vmatmul.bf16.gmra.mxu0 %v164
    %v2523 = vpop.f32.mrf.mxu0
    %v2524 = vadd.f32 %v2511, %v2523
    %v2525 = vpop.f32.mrf.mxu0
    %2526 = vdwg.mxu0
    %2527 = vmatpush.bf16.msra.mxu0 %v1844
    %2528 = vmatpush.bf16.msra.mxu0 %v1840
    %2529 = vmatpush.bf16.msra.mxu0 %v1836
    %2530 = vmatpush.bf16.msra.mxu0 %v1832
    %2531 = vmatpush.bf16.msra.mxu0 %v1828
    %2532 = vmatpush.bf16.msra.mxu0 %v1824
    %2533 = vmatpush.bf16.msra.mxu0 %v1820
    %2534 = vmatpush.bf16.msra.mxu0 %v1816
    %2535 = vmatmul.bf16.gmra.mxu0 %v165
    %v2536 = vpop.f32.mrf.mxu0
    %v2537 = vadd.f32 %v2524, %v2536
    %v2538 = vpop.f32.mrf.mxu0
    %2539 = vdwg.mxu0
    %2540 = vmatpush.bf16.msra.mxu0 %v1876
    %2541 = vmatpush.bf16.msra.mxu0 %v1872
    %2542 = vmatpush.bf16.msra.mxu0 %v1868
    %2543 = vmatpush.bf16.msra.mxu0 %v1864
    %2544 = vmatpush.bf16.msra.mxu0 %v1860
    %2545 = vmatpush.bf16.msra.mxu0 %v1856
    %2546 = vmatpush.bf16.msra.mxu0 %v1852
    %2547 = vmatpush.bf16.msra.mxu0 %v1848
    %2548 = vmatmul.bf16.gmra.mxu0 %v166
    %v2549 = vpop.f32.mrf.mxu0
    %v2550 = vadd.f32 %v2537, %v2549
    %v2551 = vpop.f32.mrf.mxu0
    %2552 = vdwg.mxu0
    %2553 = vmatpush.bf16.msra.mxu0 %v1908
    %2554 = vmatpush.bf16.msra.mxu0 %v1904
    %2555 = vmatpush.bf16.msra.mxu0 %v1900
    %2556 = vmatpush.bf16.msra.mxu0 %v1896
    %2557 = vmatpush.bf16.msra.mxu0 %v1892
    %2558 = vmatpush.bf16.msra.mxu0 %v1888
    %2559 = vmatpush.bf16.msra.mxu0 %v1884
    %2560 = vmatpush.bf16.msra.mxu0 %v1880
    %2561 = vmatmul.bf16.gmra.mxu0 %v167
    %v2562 = vpop.f32.mrf.mxu0
    %v2563 = vadd.f32 %v2550, %v2562
    %v2564 = vpop.f32.mrf.mxu0
    %2565 = vdwg.mxu0
    %2566 = vmatpush.bf16.msra.mxu0 %v1940
    %2567 = vmatpush.bf16.msra.mxu0 %v1936
    %2568 = vmatpush.bf16.msra.mxu0 %v1932
    %2569 = vmatpush.bf16.msra.mxu0 %v1928
    %2570 = vmatpush.bf16.msra.mxu0 %v1924
    %2571 = vmatpush.bf16.msra.mxu0 %v1920
    %2572 = vmatpush.bf16.msra.mxu0 %v1916
    %2573 = vmatpush.bf16.msra.mxu0 %v1912
    %2574 = vmatmul.bf16.gmra.mxu0 %v168
    %v2575 = vpop.f32.mrf.mxu0
    %v2576 = vadd.f32 %v2563, %v2575
    %v2577 = vpop.f32.mrf.mxu0
    %2578 = vdwg.mxu0
    %2579 = vmatpush.bf16.msra.mxu0 %v1972
    %2580 = vmatpush.bf16.msra.mxu0 %v1968
    %2581 = vmatpush.bf16.msra.mxu0 %v1964
    %2582 = vmatpush.bf16.msra.mxu0 %v1960
    %2583 = vmatpush.bf16.msra.mxu0 %v1956
    %2584 = vmatpush.bf16.msra.mxu0 %v1952
    %2585 = vmatpush.bf16.msra.mxu0 %v1948
    %2586 = vmatpush.bf16.msra.mxu0 %v1944
    %2587 = vmatmul.bf16.gmra.mxu0 %v169
    %v2588 = vpop.f32.mrf.mxu0
    %v2589 = vadd.f32 %v2576, %v2588
    %v2590 = vpop.f32.mrf.mxu0
    %2591 = vdwg.mxu0
    %2592 = vmatpush.bf16.msra.mxu0 %v2004
    %2593 = vmatpush.bf16.msra.mxu0 %v2000
    %2594 = vmatpush.bf16.msra.mxu0 %v1996
    %2595 = vmatpush.bf16.msra.mxu0 %v1992
    %2596 = vmatpush.bf16.msra.mxu0 %v1988
    %2597 = vmatpush.bf16.msra.mxu0 %v1984
    %2598 = vmatpush.bf16.msra.mxu0 %v1980
    %2599 = vmatpush.bf16.msra.mxu0 %v1976
    %2600 = vmatmul.bf16.gmra.mxu0 %v170
    %v2601 = vpop.f32.mrf.mxu0
    %v2602 = vadd.f32 %v2589, %v2601
    %v2603 = vpop.f32.mrf.mxu0
    %2604 = vdwg.mxu0
    %2605 = vmatpush.bf16.msra.mxu0 %v2036
    %2606 = vmatpush.bf16.msra.mxu0 %v2032
    %2607 = vmatpush.bf16.msra.mxu0 %v2028
    %2608 = vmatpush.bf16.msra.mxu0 %v2024
    %2609 = vmatpush.bf16.msra.mxu0 %v2020
    %2610 = vmatpush.bf16.msra.mxu0 %v2016
    %2611 = vmatpush.bf16.msra.mxu0 %v2012
    %2612 = vmatpush.bf16.msra.mxu0 %v2008
    %2613 = vmatmul.bf16.gmra.mxu0 %v171
    %v2614 = vpop.f32.mrf.mxu0
    %v2615 = vadd.f32 %v2602, %v2614
    %v2616 = vpop.f32.mrf.mxu0
    %2617 = vdwg.mxu0
    %2618 = vmatpush.bf16.msra.mxu0 %v2068
    %2619 = vmatpush.bf16.msra.mxu0 %v2064
    %2620 = vmatpush.bf16.msra.mxu0 %v2060
    %2621 = vmatpush.bf16.msra.mxu0 %v2056
    %2622 = vmatpush.bf16.msra.mxu0 %v2052
    %2623 = vmatpush.bf16.msra.mxu0 %v2048
    %2624 = vmatpush.bf16.msra.mxu0 %v2044
    %2625 = vmatpush.bf16.msra.mxu0 %v2040
    %2626 = vmatmul.bf16.gmra.mxu0 %v172
    %v2627 = vpop.f32.mrf.mxu0
    %v2628 = vadd.f32 %v2615, %v2627
    %v2629 = vpop.f32.mrf.mxu0
    %2630 = vdwg.mxu0
    %2631 = vmatpush.bf16.msra.mxu0 %v2100
    %2632 = vmatpush.bf16.msra.mxu0 %v2096
    %2633 = vmatpush.bf16.msra.mxu0 %v2092
    %2634 = vmatpush.bf16.msra.mxu0 %v2088
    %2635 = vmatpush.bf16.msra.mxu0 %v2084
    %2636 = vmatpush.bf16.msra.mxu0 %v2080
    %2637 = vmatpush.bf16.msra.mxu0 %v2076
    %2638 = vmatpush.bf16.msra.mxu0 %v2072
    %2639 = vmatmul.bf16.gmra.mxu0 %v173
    %v2640 = vpop.f32.mrf.mxu0
    %v2641 = vadd.f32 %v2628, %v2640
    %v2642 = vpop.f32.mrf.mxu0
    %2643 = vdwg.mxu0
    %2644 = vmatpush.bf16.msra.mxu0 %v1749
    %2645 = vmatpush.bf16.msra.mxu0 %v1745
    %2646 = vmatpush.bf16.msra.mxu0 %v1741
    %2647 = vmatpush.bf16.msra.mxu0 %v1737
    %2648 = vmatpush.bf16.msra.mxu0 %v1733
    %2649 = vmatpush.bf16.msra.mxu0 %v1729
    %2650 = vmatpush.bf16.msra.mxu0 %v1725
    %2651 = vmatpush.bf16.msra.mxu0 %v1721
    %2652 = vmatmul.bf16.gmra.mxu0 %v162
    %v2653 = vpop.f32.mrf.mxu0
    %v2654 = vadd.f32 %v561, %v2653
    %v2655 = vpop.f32.mrf.mxu0
    %2656 = vdwg.mxu0
    %2657 = vmatpush.bf16.msra.mxu0 %v1781
    %2658 = vmatpush.bf16.msra.mxu0 %v1777
    %2659 = vmatpush.bf16.msra.mxu0 %v1773
    %2660 = vmatpush.bf16.msra.mxu0 %v1769
    %2661 = vmatpush.bf16.msra.mxu0 %v1765
    %2662 = vmatpush.bf16.msra.mxu0 %v1761
    %2663 = vmatpush.bf16.msra.mxu0 %v1757
    %2664 = vmatpush.bf16.msra.mxu0 %v1753
    %2665 = vmatmul.bf16.gmra.mxu0 %v163
    %v2666 = vpop.f32.mrf.mxu0
    %v2667 = vadd.f32 %v2654, %v2666
    %v2668 = vpop.f32.mrf.mxu0
    %2669 = vdwg.mxu0
    %2670 = vmatpush.bf16.msra.mxu0 %v1813
    %2671 = vmatpush.bf16.msra.mxu0 %v1809
    %2672 = vmatpush.bf16.msra.mxu0 %v1805
    %2673 = vmatpush.bf16.msra.mxu0 %v1801
    %2674 = vmatpush.bf16.msra.mxu0 %v1797
    %2675 = vmatpush.bf16.msra.mxu0 %v1793
    %2676 = vmatpush.bf16.msra.mxu0 %v1789
    %2677 = vmatpush.bf16.msra.mxu0 %v1785
    %2678 = vmatmul.bf16.gmra.mxu0 %v164
    %v2679 = vpop.f32.mrf.mxu0
    %v2680 = vadd.f32 %v2667, %v2679
    %v2681 = vpop.f32.mrf.mxu0
    %2682 = vdwg.mxu0
    %2683 = vmatpush.bf16.msra.mxu0 %v1845
    %2684 = vmatpush.bf16.msra.mxu0 %v1841
    %2685 = vmatpush.bf16.msra.mxu0 %v1837
    %2686 = vmatpush.bf16.msra.mxu0 %v1833
    %2687 = vmatpush.bf16.msra.mxu0 %v1829
    %2688 = vmatpush.bf16.msra.mxu0 %v1825
    %2689 = vmatpush.bf16.msra.mxu0 %v1821
    %2690 = vmatpush.bf16.msra.mxu0 %v1817
    %2691 = vmatmul.bf16.gmra.mxu0 %v165
    %v2692 = vpop.f32.mrf.mxu0
    %v2693 = vadd.f32 %v2680, %v2692
    %v2694 = vpop.f32.mrf.mxu0
    %2695 = vdwg.mxu0
    %2696 = vmatpush.bf16.msra.mxu0 %v1877
    %2697 = vmatpush.bf16.msra.mxu0 %v1873
    %2698 = vmatpush.bf16.msra.mxu0 %v1869
    %2699 = vmatpush.bf16.msra.mxu0 %v1865
    %2700 = vmatpush.bf16.msra.mxu0 %v1861
    %2701 = vmatpush.bf16.msra.mxu0 %v1857
    %2702 = vmatpush.bf16.msra.mxu0 %v1853
    %2703 = vmatpush.bf16.msra.mxu0 %v1849
    %2704 = vmatmul.bf16.gmra.mxu0 %v166
    %v2705 = vpop.f32.mrf.mxu0
    %v2706 = vadd.f32 %v2693, %v2705
    %v2707 = vpop.f32.mrf.mxu0
    %2708 = vdwg.mxu0
    %2709 = vmatpush.bf16.msra.mxu0 %v1909
    %2710 = vmatpush.bf16.msra.mxu0 %v1905
    %2711 = vmatpush.bf16.msra.mxu0 %v1901
    %2712 = vmatpush.bf16.msra.mxu0 %v1897
    %2713 = vmatpush.bf16.msra.mxu0 %v1893
    %2714 = vmatpush.bf16.msra.mxu0 %v1889
    %2715 = vmatpush.bf16.msra.mxu0 %v1885
    %2716 = vmatpush.bf16.msra.mxu0 %v1881
    %2717 = vmatmul.bf16.gmra.mxu0 %v167
    %v2718 = vpop.f32.mrf.mxu0
    %v2719 = vadd.f32 %v2706, %v2718
    %v2720 = vpop.f32.mrf.mxu0
    %2721 = vdwg.mxu0
    %2722 = vmatpush.bf16.msra.mxu0 %v1941
    %2723 = vmatpush.bf16.msra.mxu0 %v1937
    %2724 = vmatpush.bf16.msra.mxu0 %v1933
    %2725 = vmatpush.bf16.msra.mxu0 %v1929
    %2726 = vmatpush.bf16.msra.mxu0 %v1925
    %2727 = vmatpush.bf16.msra.mxu0 %v1921
    %2728 = vmatpush.bf16.msra.mxu0 %v1917
    %2729 = vmatpush.bf16.msra.mxu0 %v1913
    %2730 = vmatmul.bf16.gmra.mxu0 %v168
    %v2731 = vpop.f32.mrf.mxu0
    %v2732 = vadd.f32 %v2719, %v2731
    %v2733 = vpop.f32.mrf.mxu0
    %2734 = vdwg.mxu0
    %2735 = vmatpush.bf16.msra.mxu0 %v1973
    %2736 = vmatpush.bf16.msra.mxu0 %v1969
    %2737 = vmatpush.bf16.msra.mxu0 %v1965
    %2738 = vmatpush.bf16.msra.mxu0 %v1961
    %2739 = vmatpush.bf16.msra.mxu0 %v1957
    %2740 = vmatpush.bf16.msra.mxu0 %v1953
    %2741 = vmatpush.bf16.msra.mxu0 %v1949
    %2742 = vmatpush.bf16.msra.mxu0 %v1945
    %2743 = vmatmul.bf16.gmra.mxu0 %v169
    %v2744 = vpop.f32.mrf.mxu0
    %v2745 = vadd.f32 %v2732, %v2744
    %v2746 = vpop.f32.mrf.mxu0
    %2747 = vdwg.mxu0
    %2748 = vmatpush.bf16.msra.mxu0 %v2005
    %2749 = vmatpush.bf16.msra.mxu0 %v2001
    %2750 = vmatpush.bf16.msra.mxu0 %v1997
    %2751 = vmatpush.bf16.msra.mxu0 %v1993
    %2752 = vmatpush.bf16.msra.mxu0 %v1989
    %2753 = vmatpush.bf16.msra.mxu0 %v1985
    %2754 = vmatpush.bf16.msra.mxu0 %v1981
    %2755 = vmatpush.bf16.msra.mxu0 %v1977
    %2756 = vmatmul.bf16.gmra.mxu0 %v170
    %v2757 = vpop.f32.mrf.mxu0
    %v2758 = vadd.f32 %v2745, %v2757
    %v2759 = vpop.f32.mrf.mxu0
    %2760 = vdwg.mxu0
    %2761 = vmatpush.bf16.msra.mxu0 %v2037
    %2762 = vmatpush.bf16.msra.mxu0 %v2033
    %2763 = vmatpush.bf16.msra.mxu0 %v2029
    %2764 = vmatpush.bf16.msra.mxu0 %v2025
    %2765 = vmatpush.bf16.msra.mxu0 %v2021
    %2766 = vmatpush.bf16.msra.mxu0 %v2017
    %2767 = vmatpush.bf16.msra.mxu0 %v2013
    %2768 = vmatpush.bf16.msra.mxu0 %v2009
    %2769 = vmatmul.bf16.gmra.mxu0 %v171
    %v2770 = vpop.f32.mrf.mxu0
    %v2771 = vadd.f32 %v2758, %v2770
    %v2772 = vpop.f32.mrf.mxu0
    %2773 = vdwg.mxu0
    %2774 = vmatpush.bf16.msra.mxu0 %v2069
    %2775 = vmatpush.bf16.msra.mxu0 %v2065
    %2776 = vmatpush.bf16.msra.mxu0 %v2061
    %2777 = vmatpush.bf16.msra.mxu0 %v2057
    %2778 = vmatpush.bf16.msra.mxu0 %v2053
    %2779 = vmatpush.bf16.msra.mxu0 %v2049
    %2780 = vmatpush.bf16.msra.mxu0 %v2045
    %2781 = vmatpush.bf16.msra.mxu0 %v2041
    %2782 = vmatmul.bf16.gmra.mxu0 %v172
    %v2783 = vpop.f32.mrf.mxu0
    %v2784 = vadd.f32 %v2771, %v2783
    %v2785 = vpop.f32.mrf.mxu0
    %2786 = vdwg.mxu0
    %2787 = vmatpush.bf16.msra.mxu0 %v2101
    %2788 = vmatpush.bf16.msra.mxu0 %v2097
    %2789 = vmatpush.bf16.msra.mxu0 %v2093
    %2790 = vmatpush.bf16.msra.mxu0 %v2089
    %2791 = vmatpush.bf16.msra.mxu0 %v2085
    %2792 = vmatpush.bf16.msra.mxu0 %v2081
    %2793 = vmatpush.bf16.msra.mxu0 %v2077
    %2794 = vmatpush.bf16.msra.mxu0 %v2073
    %2795 = vmatmul.bf16.gmra.mxu0 %v173
    %v2796 = vpop.f32.mrf.mxu0
    %v2797 = vadd.f32 %v2784, %v2796
    %v2798 = vpop.f32.mrf.mxu0
    %2799 = vdwg.mxu0
    %2800 = vmatpush.bf16.msra.mxu0 %v1750
    %2801 = vmatpush.bf16.msra.mxu0 %v1746
    %2802 = vmatpush.bf16.msra.mxu0 %v1742
    %2803 = vmatpush.bf16.msra.mxu0 %v1738
    %2804 = vmatpush.bf16.msra.mxu0 %v1734
    %2805 = vmatpush.bf16.msra.mxu0 %v1730
    %2806 = vmatpush.bf16.msra.mxu0 %v1726
    %2807 = vmatpush.bf16.msra.mxu0 %v1722
    %2808 = vmatmul.bf16.gmra.mxu0 %v162
    %v2809 = vpop.f32.mrf.mxu0
    %v2810 = vadd.f32 %v562, %v2809
    %v2811 = vpop.f32.mrf.mxu0
    %2812 = vdwg.mxu0
    %2813 = vmatpush.bf16.msra.mxu0 %v1782
    %2814 = vmatpush.bf16.msra.mxu0 %v1778
    %2815 = vmatpush.bf16.msra.mxu0 %v1774
    %2816 = vmatpush.bf16.msra.mxu0 %v1770
    %2817 = vmatpush.bf16.msra.mxu0 %v1766
    %2818 = vmatpush.bf16.msra.mxu0 %v1762
    %2819 = vmatpush.bf16.msra.mxu0 %v1758
    %2820 = vmatpush.bf16.msra.mxu0 %v1754
    %2821 = vmatmul.bf16.gmra.mxu0 %v163
    %v2822 = vpop.f32.mrf.mxu0
    %v2823 = vadd.f32 %v2810, %v2822
    %v2824 = vpop.f32.mrf.mxu0
    %2825 = vdwg.mxu0
    %2826 = vmatpush.bf16.msra.mxu0 %v1814
    %2827 = vmatpush.bf16.msra.mxu0 %v1810
    %2828 = vmatpush.bf16.msra.mxu0 %v1806
    %2829 = vmatpush.bf16.msra.mxu0 %v1802
    %2830 = vmatpush.bf16.msra.mxu0 %v1798
    %2831 = vmatpush.bf16.msra.mxu0 %v1794
    %2832 = vmatpush.bf16.msra.mxu0 %v1790
    %2833 = vmatpush.bf16.msra.mxu0 %v1786
    %2834 = vmatmul.bf16.gmra.mxu0 %v164
    %v2835 = vpop.f32.mrf.mxu0
    %v2836 = vadd.f32 %v2823, %v2835
    %v2837 = vpop.f32.mrf.mxu0
    %2838 = vdwg.mxu0
    %2839 = vmatpush.bf16.msra.mxu0 %v1846
    %2840 = vmatpush.bf16.msra.mxu0 %v1842
    %2841 = vmatpush.bf16.msra.mxu0 %v1838
    %2842 = vmatpush.bf16.msra.mxu0 %v1834
    %2843 = vmatpush.bf16.msra.mxu0 %v1830
    %2844 = vmatpush.bf16.msra.mxu0 %v1826
    %2845 = vmatpush.bf16.msra.mxu0 %v1822
    %2846 = vmatpush.bf16.msra.mxu0 %v1818
    %2847 = vmatmul.bf16.gmra.mxu0 %v165
    %v2848 = vpop.f32.mrf.mxu0
    %v2849 = vadd.f32 %v2836, %v2848
    %v2850 = vpop.f32.mrf.mxu0
    %2851 = vdwg.mxu0
    %2852 = vmatpush.bf16.msra.mxu0 %v1878
    %2853 = vmatpush.bf16.msra.mxu0 %v1874
    %2854 = vmatpush.bf16.msra.mxu0 %v1870
    %2855 = vmatpush.bf16.msra.mxu0 %v1866
    %2856 = vmatpush.bf16.msra.mxu0 %v1862
    %2857 = vmatpush.bf16.msra.mxu0 %v1858
    %2858 = vmatpush.bf16.msra.mxu0 %v1854
    %2859 = vmatpush.bf16.msra.mxu0 %v1850
    %2860 = vmatmul.bf16.gmra.mxu0 %v166
    %v2861 = vpop.f32.mrf.mxu0
    %v2862 = vadd.f32 %v2849, %v2861
    %v2863 = vpop.f32.mrf.mxu0
    %2864 = vdwg.mxu0
    %2865 = vmatpush.bf16.msra.mxu0 %v1910
    %2866 = vmatpush.bf16.msra.mxu0 %v1906
    %2867 = vmatpush.bf16.msra.mxu0 %v1902
    %2868 = vmatpush.bf16.msra.mxu0 %v1898
    %2869 = vmatpush.bf16.msra.mxu0 %v1894
    %2870 = vmatpush.bf16.msra.mxu0 %v1890
    %2871 = vmatpush.bf16.msra.mxu0 %v1886
    %2872 = vmatpush.bf16.msra.mxu0 %v1882
    %2873 = vmatmul.bf16.gmra.mxu0 %v167
    %v2874 = vpop.f32.mrf.mxu0
    %v2875 = vadd.f32 %v2862, %v2874
    %v2876 = vpop.f32.mrf.mxu0
    %2877 = vdwg.mxu0
    %2878 = vmatpush.bf16.msra.mxu0 %v1942
    %2879 = vmatpush.bf16.msra.mxu0 %v1938
    %2880 = vmatpush.bf16.msra.mxu0 %v1934
    %2881 = vmatpush.bf16.msra.mxu0 %v1930
    %2882 = vmatpush.bf16.msra.mxu0 %v1926
    %2883 = vmatpush.bf16.msra.mxu0 %v1922
    %2884 = vmatpush.bf16.msra.mxu0 %v1918
    %2885 = vmatpush.bf16.msra.mxu0 %v1914
    %2886 = vmatmul.bf16.gmra.mxu0 %v168
    %v2887 = vpop.f32.mrf.mxu0
    %v2888 = vadd.f32 %v2875, %v2887
    %v2889 = vpop.f32.mrf.mxu0
    %2890 = vdwg.mxu0
    %2891 = vmatpush.bf16.msra.mxu0 %v1974
    %2892 = vmatpush.bf16.msra.mxu0 %v1970
    %2893 = vmatpush.bf16.msra.mxu0 %v1966
    %2894 = vmatpush.bf16.msra.mxu0 %v1962
    %2895 = vmatpush.bf16.msra.mxu0 %v1958
    %2896 = vmatpush.bf16.msra.mxu0 %v1954
    %2897 = vmatpush.bf16.msra.mxu0 %v1950
    %2898 = vmatpush.bf16.msra.mxu0 %v1946
    %2899 = vmatmul.bf16.gmra.mxu0 %v169
    %v2900 = vpop.f32.mrf.mxu0
    %v2901 = vadd.f32 %v2888, %v2900
    %v2902 = vpop.f32.mrf.mxu0
    %2903 = vdwg.mxu0
    %2904 = vmatpush.bf16.msra.mxu0 %v2006
    %2905 = vmatpush.bf16.msra.mxu0 %v2002
    %2906 = vmatpush.bf16.msra.mxu0 %v1998
    %2907 = vmatpush.bf16.msra.mxu0 %v1994
    %2908 = vmatpush.bf16.msra.mxu0 %v1990
    %2909 = vmatpush.bf16.msra.mxu0 %v1986
    %2910 = vmatpush.bf16.msra.mxu0 %v1982
    %2911 = vmatpush.bf16.msra.mxu0 %v1978
    %2912 = vmatmul.bf16.gmra.mxu0 %v170
    %v2913 = vpop.f32.mrf.mxu0
    %v2914 = vadd.f32 %v2901, %v2913
    %v2915 = vpop.f32.mrf.mxu0
    %2916 = vdwg.mxu0
    %2917 = vmatpush.bf16.msra.mxu0 %v2038
    %2918 = vmatpush.bf16.msra.mxu0 %v2034
    %2919 = vmatpush.bf16.msra.mxu0 %v2030
    %2920 = vmatpush.bf16.msra.mxu0 %v2026
    %2921 = vmatpush.bf16.msra.mxu0 %v2022
    %2922 = vmatpush.bf16.msra.mxu0 %v2018
    %2923 = vmatpush.bf16.msra.mxu0 %v2014
    %2924 = vmatpush.bf16.msra.mxu0 %v2010
    %2925 = vmatmul.bf16.gmra.mxu0 %v171
    %v2926 = vpop.f32.mrf.mxu0
    %v2927 = vadd.f32 %v2914, %v2926
    %v2928 = vpop.f32.mrf.mxu0
    %2929 = vdwg.mxu0
    %2930 = vmatpush.bf16.msra.mxu0 %v2070
    %2931 = vmatpush.bf16.msra.mxu0 %v2066
    %2932 = vmatpush.bf16.msra.mxu0 %v2062
    %2933 = vmatpush.bf16.msra.mxu0 %v2058
    %2934 = vmatpush.bf16.msra.mxu0 %v2054
    %2935 = vmatpush.bf16.msra.mxu0 %v2050
    %2936 = vmatpush.bf16.msra.mxu0 %v2046
    %2937 = vmatpush.bf16.msra.mxu0 %v2042
    %2938 = vmatmul.bf16.gmra.mxu0 %v172
    %v2939 = vpop.f32.mrf.mxu0
    %v2940 = vadd.f32 %v2927, %v2939
    %v2941 = vpop.f32.mrf.mxu0
    %2942 = vdwg.mxu0
    %2943 = vmatpush.bf16.msra.mxu0 %v2102
    %2944 = vmatpush.bf16.msra.mxu0 %v2098
    %2945 = vmatpush.bf16.msra.mxu0 %v2094
    %2946 = vmatpush.bf16.msra.mxu0 %v2090
    %2947 = vmatpush.bf16.msra.mxu0 %v2086
    %2948 = vmatpush.bf16.msra.mxu0 %v2082
    %2949 = vmatpush.bf16.msra.mxu0 %v2078
    %2950 = vmatpush.bf16.msra.mxu0 %v2074
    %2951 = vmatmul.bf16.gmra.mxu0 %v173
    %v2952 = vpop.f32.mrf.mxu0
    %v2953 = vadd.f32 %v2940, %v2952
    %v2954 = vpop.f32.mrf.mxu0
    %2955 = vdwg.mxu0
    %2956 = vmatpush.bf16.msra.mxu0 %v1751
    %2957 = vmatpush.bf16.msra.mxu0 %v1747
    %2958 = vmatpush.bf16.msra.mxu0 %v1743
    %2959 = vmatpush.bf16.msra.mxu0 %v1739
    %2960 = vmatpush.bf16.msra.mxu0 %v1735
    %2961 = vmatpush.bf16.msra.mxu0 %v1731
    %2962 = vmatpush.bf16.msra.mxu0 %v1727
    %2963 = vmatpush.bf16.msra.mxu0 %v1723
    %2964 = vmatmul.bf16.gmra.mxu0 %v162
    %v2965 = vpop.f32.mrf.mxu0
    %v2966 = vadd.f32 %v563, %v2965
    %v2967 = vpop.f32.mrf.mxu0
    %2968 = vdwg.mxu0
    %2969 = vmatpush.bf16.msra.mxu0 %v1783
    %2970 = vmatpush.bf16.msra.mxu0 %v1779
    %2971 = vmatpush.bf16.msra.mxu0 %v1775
    %2972 = vmatpush.bf16.msra.mxu0 %v1771
    %2973 = vmatpush.bf16.msra.mxu0 %v1767
    %2974 = vmatpush.bf16.msra.mxu0 %v1763
    %2975 = vmatpush.bf16.msra.mxu0 %v1759
    %2976 = vmatpush.bf16.msra.mxu0 %v1755
    %2977 = vmatmul.bf16.gmra.mxu0 %v163
    %v2978 = vpop.f32.mrf.mxu0
    %v2979 = vadd.f32 %v2966, %v2978
    %v2980 = vpop.f32.mrf.mxu0
    %2981 = vdwg.mxu0
    %2982 = vmatpush.bf16.msra.mxu0 %v1815
    %2983 = vmatpush.bf16.msra.mxu0 %v1811
    %2984 = vmatpush.bf16.msra.mxu0 %v1807
    %2985 = vmatpush.bf16.msra.mxu0 %v1803
    %2986 = vmatpush.bf16.msra.mxu0 %v1799
    %2987 = vmatpush.bf16.msra.mxu0 %v1795
    %2988 = vmatpush.bf16.msra.mxu0 %v1791
    %2989 = vmatpush.bf16.msra.mxu0 %v1787
    %2990 = vmatmul.bf16.gmra.mxu0 %v164
    %v2991 = vpop.f32.mrf.mxu0
    %v2992 = vadd.f32 %v2979, %v2991
    %v2993 = vpop.f32.mrf.mxu0
    %2994 = vdwg.mxu0
    %2995 = vmatpush.bf16.msra.mxu0 %v1847
    %2996 = vmatpush.bf16.msra.mxu0 %v1843
    %2997 = vmatpush.bf16.msra.mxu0 %v1839
    %2998 = vmatpush.bf16.msra.mxu0 %v1835
    %2999 = vmatpush.bf16.msra.mxu0 %v1831
    %3000 = vmatpush.bf16.msra.mxu0 %v1827
    %3001 = vmatpush.bf16.msra.mxu0 %v1823
    %3002 = vmatpush.bf16.msra.mxu0 %v1819
    %3003 = vmatmul.bf16.gmra.mxu0 %v165
    %v3004 = vpop.f32.mrf.mxu0
    %v3005 = vadd.f32 %v2992, %v3004
    %v3006 = vpop.f32.mrf.mxu0
    %3007 = vdwg.mxu0
    %3008 = vmatpush.bf16.msra.mxu0 %v1879
    %3009 = vmatpush.bf16.msra.mxu0 %v1875
    %3010 = vmatpush.bf16.msra.mxu0 %v1871
    %3011 = vmatpush.bf16.msra.mxu0 %v1867
    %3012 = vmatpush.bf16.msra.mxu0 %v1863
    %3013 = vmatpush.bf16.msra.mxu0 %v1859
    %3014 = vmatpush.bf16.msra.mxu0 %v1855
    %3015 = vmatpush.bf16.msra.mxu0 %v1851
    %3016 = vmatmul.bf16.gmra.mxu0 %v166
    %v3017 = vpop.f32.mrf.mxu0
    %v3018 = vadd.f32 %v3005, %v3017
    %v3019 = vpop.f32.mrf.mxu0
    %3020 = vdwg.mxu0
    %3021 = vmatpush.bf16.msra.mxu0 %v1911
    %3022 = vmatpush.bf16.msra.mxu0 %v1907
    %3023 = vmatpush.bf16.msra.mxu0 %v1903
    %3024 = vmatpush.bf16.msra.mxu0 %v1899
    %3025 = vmatpush.bf16.msra.mxu0 %v1895
    %3026 = vmatpush.bf16.msra.mxu0 %v1891
    %3027 = vmatpush.bf16.msra.mxu0 %v1887
    %3028 = vmatpush.bf16.msra.mxu0 %v1883
    %3029 = vmatmul.bf16.gmra.mxu0 %v167
    %v3030 = vpop.f32.mrf.mxu0
    %v3031 = vadd.f32 %v3018, %v3030
    %v3032 = vpop.f32.mrf.mxu0
    %3033 = vdwg.mxu0
    %3034 = vmatpush.bf16.msra.mxu0 %v1943
    %3035 = vmatpush.bf16.msra.mxu0 %v1939
    %3036 = vmatpush.bf16.msra.mxu0 %v1935
    %3037 = vmatpush.bf16.msra.mxu0 %v1931
    %3038 = vmatpush.bf16.msra.mxu0 %v1927
    %3039 = vmatpush.bf16.msra.mxu0 %v1923
    %3040 = vmatpush.bf16.msra.mxu0 %v1919
    %3041 = vmatpush.bf16.msra.mxu0 %v1915
    %3042 = vmatmul.bf16.gmra.mxu0 %v168
    %v3043 = vpop.f32.mrf.mxu0
    %v3044 = vadd.f32 %v3031, %v3043
    %v3045 = vpop.f32.mrf.mxu0
    %3046 = vdwg.mxu0
    %3047 = vmatpush.bf16.msra.mxu0 %v1975
    %3048 = vmatpush.bf16.msra.mxu0 %v1971
    %3049 = vmatpush.bf16.msra.mxu0 %v1967
    %3050 = vmatpush.bf16.msra.mxu0 %v1963
    %3051 = vmatpush.bf16.msra.mxu0 %v1959
    %3052 = vmatpush.bf16.msra.mxu0 %v1955
    %3053 = vmatpush.bf16.msra.mxu0 %v1951
    %3054 = vmatpush.bf16.msra.mxu0 %v1947
    %3055 = vmatmul.bf16.gmra.mxu0 %v169
    %v3056 = vpop.f32.mrf.mxu0
    %v3057 = vadd.f32 %v3044, %v3056
    %v3058 = vpop.f32.mrf.mxu0
    %3059 = vdwg.mxu0
    %3060 = vmatpush.bf16.msra.mxu0 %v2007
    %3061 = vmatpush.bf16.msra.mxu0 %v2003
    %3062 = vmatpush.bf16.msra.mxu0 %v1999
    %3063 = vmatpush.bf16.msra.mxu0 %v1995
    %3064 = vmatpush.bf16.msra.mxu0 %v1991
    %3065 = vmatpush.bf16.msra.mxu0 %v1987
    %3066 = vmatpush.bf16.msra.mxu0 %v1983
    %3067 = vmatpush.bf16.msra.mxu0 %v1979
    %3068 = vmatmul.bf16.gmra.mxu0 %v170
    %v3069 = vpop.f32.mrf.mxu0
    %v3070 = vadd.f32 %v3057, %v3069
    %v3071 = vpop.f32.mrf.mxu0
    %3072 = vdwg.mxu0
    %3073 = vmatpush.bf16.msra.mxu0 %v2039
    %3074 = vmatpush.bf16.msra.mxu0 %v2035
    %3075 = vmatpush.bf16.msra.mxu0 %v2031
    %3076 = vmatpush.bf16.msra.mxu0 %v2027
    %3077 = vmatpush.bf16.msra.mxu0 %v2023
    %3078 = vmatpush.bf16.msra.mxu0 %v2019
    %3079 = vmatpush.bf16.msra.mxu0 %v2015
    %3080 = vmatpush.bf16.msra.mxu0 %v2011
    %3081 = vmatmul.bf16.gmra.mxu0 %v171
    %v3082 = vpop.f32.mrf.mxu0
    %v3083 = vadd.f32 %v3070, %v3082
    %v3084 = vpop.f32.mrf.mxu0
    %3085 = vdwg.mxu0
    %3086 = vmatpush.bf16.msra.mxu0 %v2071
    %3087 = vmatpush.bf16.msra.mxu0 %v2067
    %3088 = vmatpush.bf16.msra.mxu0 %v2063
    %3089 = vmatpush.bf16.msra.mxu0 %v2059
    %3090 = vmatpush.bf16.msra.mxu0 %v2055
    %3091 = vmatpush.bf16.msra.mxu0 %v2051
    %3092 = vmatpush.bf16.msra.mxu0 %v2047
    %3093 = vmatpush.bf16.msra.mxu0 %v2043
    %3094 = vmatmul.bf16.gmra.mxu0 %v172
    %v3095 = vpop.f32.mrf.mxu0
    %v3096 = vadd.f32 %v3083, %v3095
    %v3097 = vpop.f32.mrf.mxu0
    %3098 = vdwg.mxu0
    %3099 = vmatpush.bf16.msra.mxu0 %v2103
    %3100 = vmatpush.bf16.msra.mxu0 %v2099
    %3101 = vmatpush.bf16.msra.mxu0 %v2095
    %3102 = vmatpush.bf16.msra.mxu0 %v2091
    %3103 = vmatpush.bf16.msra.mxu0 %v2087
    %3104 = vmatpush.bf16.msra.mxu0 %v2083
    %3105 = vmatpush.bf16.msra.mxu0 %v2079
    %3106 = vmatpush.bf16.msra.mxu0 %v2075
    %3107 = vmatmul.bf16.gmra.mxu0 %v173
    %v3108 = vpop.f32.mrf.mxu0
    %v3109 = vadd.f32 %v3096, %v3108
    %v3110 = vpop.f32.mrf.mxu0
    %3111 = vdwg.mxu0
    %v3112 = vmul.f32 %v2641, 0.5
    %v3113 = vmul.f32 %v2797, 0.5
    %v3114 = vmul.f32 %v2953, 0.5
    %v3115 = vmul.f32 %v3109, 0.5
    %v3116 = vmul.f32 %v2641, 0.70710677
    %v3117 = vmul.f32 %v2797, 0.70710677
    %v3118 = vmul.f32 %v2953, 0.70710677
    %v3119 = vmul.f32 %v3109, 0.70710677
    %v3120 = vand.u32 2147483647, %v3116
    %v3121 = vand.u32 2147483647, %v3117
    %v3122 = vand.u32 2147483647, %v3118
    %v3123 = vand.u32 2147483647, %v3119
    %v3124 = vmul.f32 %v3120, 0.3275911
    %v3125 = vmul.f32 %v3121, 0.3275911
    %v3126 = vmul.f32 %v3122, 0.3275911
    %v3127 = vmul.f32 %v3123, 0.3275911
    %v3128 = vadd.f32 %v3124, 1.0
    %v3129 = vadd.f32 %v3125, 1.0
    %v3130 = vadd.f32 %v3126, 1.0
    %v3131 = vadd.f32 %v3127, 1.0
    %v3132 = vrcp.pop %v3128
    %v3133 = vrcp.pop %v3129
    %v3134 = vrcp.pop %v3130
    %v3135 = vrcp.pop %v3131
    %v3136 = vmul.f32 %v3132, 1.0614054
    %v3137 = vmul.f32 %v3133, 1.0614054
    %v3138 = vmul.f32 %v3134, 1.0614054
    %v3139 = vmul.f32 %v3135, 1.0614054
    %v3140 = vadd.f32 %v3136, -1.4531521
    %v3141 = vadd.f32 %v3137, -1.4531521
    %v3142 = vadd.f32 %v3138, -1.4531521
    %v3143 = vadd.f32 %v3139, -1.4531521
    %v3144 = vmul.f32 %v3132, %v3140
    %v3145 = vmul.f32 %v3133, %v3141
    %v3146 = vmul.f32 %v3134, %v3142
    %v3147 = vmul.f32 %v3135, %v3143
    %v3148 = vadd.f32 %v3144, 1.4214138
    %v3149 = vadd.f32 %v3145, 1.4214138
    %v3150 = vadd.f32 %v3146, 1.4214138
    %v3151 = vadd.f32 %v3147, 1.4214138
    %v3152 = vmul.f32 %v3132, %v3148
    %v3153 = vmul.f32 %v3133, %v3149
    %v3154 = vmul.f32 %v3134, %v3150
    %v3155 = vmul.f32 %v3135, %v3151
    %v3156 = vadd.f32 %v3152, -0.28449672
    %v3157 = vadd.f32 %v3153, -0.28449672
    %v3158 = vadd.f32 %v3154, -0.28449672
    %v3159 = vadd.f32 %v3155, -0.28449672
    %v3160 = vmul.f32 %v3132, %v3156
    %v3161 = vmul.f32 %v3133, %v3157
    %v3162 = vmul.f32 %v3134, %v3158
    %v3163 = vmul.f32 %v3135, %v3159
    %v3164 = vadd.f32 %v3160, 0.2548296
    %v3165 = vadd.f32 %v3161, 0.2548296
    %v3166 = vadd.f32 %v3162, 0.2548296
    %v3167 = vadd.f32 %v3163, 0.2548296
    %v3168 = vmul.f32 %v3132, %v3164
    %v3169 = vmul.f32 %v3133, %v3165
    %v3170 = vmul.f32 %v3134, %v3166
    %v3171 = vmul.f32 %v3135, %v3167
    %v3172 = vsub.f32 0.0, %v3120
    %v3173 = vsub.f32 0.0, %v3121
    %v3174 = vsub.f32 0.0, %v3122
    %v3175 = vsub.f32 0.0, %v3123
    %v3176 = vmul.f32 %v3172, %v3120
    %v3177 = vmul.f32 %v3173, %v3121
    %v3178 = vmul.f32 %v3174, %v3122
    %v3179 = vmul.f32 %v3175, %v3123
    %v3180 = vmul.f32 %v3176, 1.442695
    %v3181 = vpow.pop %v3180
    %v3182 = vmul.f32 %v3177, 1.442695
    %v3183 = vpow.pop %v3182
    %v3184 = vmul.f32 %v3178, 1.442695
    %v3185 = vpow.pop %v3184
    %v3186 = vmul.f32 %v3179, 1.442695
    %v3187 = vpow.pop %v3186
    %v3188 = vmul.f32 %v3168, %v3181
    %v3189 = vmul.f32 %v3169, %v3183
    %v3190 = vmul.f32 %v3170, %v3185
    %v3191 = vmul.f32 %v3171, %v3187
    %v3192 = vsub.f32 1.0, %v3188
    %v3193 = vsub.f32 1.0, %v3189
    %v3194 = vsub.f32 1.0, %v3190
    %v3195 = vsub.f32 1.0, %v3191
    %vm3196 = vcmp.ge.f32.partialorder %v3116, 0.0
    %vm3197 = vcmp.ge.f32.partialorder %v3117, 0.0
    %vm3198 = vcmp.ge.f32.partialorder %v3118, 0.0
    %vm3199 = vcmp.ge.f32.partialorder %v3119, 0.0
    %v3200 = vsub.f32 0.0, %v3192
    %v3201 = vsub.f32 0.0, %v3193
    %v3202 = vsub.f32 0.0, %v3194
    %v3203 = vsub.f32 0.0, %v3195
    %v3204 = vsel %vm3196, %v3192, %v3200
    %v3205 = vsel %vm3197, %v3193, %v3201
    %v3206 = vsel %vm3198, %v3194, %v3202
    %v3207 = vsel %vm3199, %v3195, %v3203
    %v3208 = vadd.f32 %v3204, 1.0
    %v3209 = vadd.f32 %v3205, 1.0
    %v3210 = vadd.f32 %v3206, 1.0
    %v3211 = vadd.f32 %v3207, 1.0
    %v3212 = vmul.f32 %v3112, %v3208
    %v3213 = vmul.f32 %v3113, %v3209
    %v3214 = vmul.f32 %v3114, %v3210
    %v3215 = vmul.f32 %v3115, %v3211
    %v3216 = vpack.c.bf16 %v3212, %v3212
    %v3217 = vpack.c.bf16 %v3213, %v3213
    %v3218 = vpack.c.bf16 %v3214, %v3214
    %v3219 = vpack.c.bf16 %v3215, %v3215
    %v3220 = vld [vmem:[#allocation8] sm:$0xf]
    %v3221 = vld [vmem:[#allocation8 + $0x4] sm:$0xf]
    %v3222 = vld [vmem:[#allocation8 + $0x8] sm:$0xf]
    %v3223 = vld [vmem:[#allocation8 + $0xc] sm:$0xf]
    %v3224 = vld [vmem:[#allocation8 + $0x10] sm:$0xf]
    %v3225 = vld [vmem:[#allocation8 + $0x14] sm:$0xf]
    %v3226 = vld [vmem:[#allocation8 + $0x18] sm:$0xf]
    %v3227 = vld [vmem:[#allocation8 + $0x1c] sm:$0xf]
    %v3228 = vld [vmem:[#allocation8 + $0x20] sm:$0xf]
    %v3229 = vld [vmem:[#allocation8 + $0x24] sm:$0xf]
    %v3230 = vld [vmem:[#allocation8 + $0x28] sm:$0xf]
    %v3231 = vld [vmem:[#allocation8 + $0x2c] sm:$0xf]
    %v3232 = vld [vmem:[#allocation8 + $0x30] sm:$0xf]
    %v3233 = vld [vmem:[#allocation8 + $0x34] sm:$0xf]
    %v3234 = vld [vmem:[#allocation8 + $0x38] sm:$0xf]
    %v3235 = vld [vmem:[#allocation8 + $0x3c] sm:$0xf]
    %v3236 = vld [vmem:[#allocation8 + $0x40] sm:$0xf]
    %v3237 = vld [vmem:[#allocation8 + $0x44] sm:$0xf]
    %v3238 = vld [vmem:[#allocation8 + $0x48] sm:$0xf]
    %v3239 = vld [vmem:[#allocation8 + $0x4c] sm:$0xf]
    %v3240 = vld [vmem:[#allocation8 + $0x50] sm:$0xf]
    %v3241 = vld [vmem:[#allocation8 + $0x54] sm:$0xf]
    %v3242 = vld [vmem:[#allocation8 + $0x58] sm:$0xf]
    %v3243 = vld [vmem:[#allocation8 + $0x5c] sm:$0xf]
    %v3244 = vld [vmem:[#allocation8 + $0x60] sm:$0xf]
    %v3245 = vld [vmem:[#allocation8 + $0x64] sm:$0xf]
    %v3246 = vld [vmem:[#allocation8 + $0x68] sm:$0xf]
    %v3247 = vld [vmem:[#allocation8 + $0x6c] sm:$0xf]
    %v3248 = vld [vmem:[#allocation8 + $0x70] sm:$0xf]
    %v3249 = vld [vmem:[#allocation8 + $0x74] sm:$0xf]
    %v3250 = vld [vmem:[#allocation8 + $0x78] sm:$0xf]
    %v3251 = vld [vmem:[#allocation8 + $0x7c] sm:$0xf]
    %v3252 = vld [vmem:[#allocation8 + $0x80] sm:$0xf]
    %v3253 = vld [vmem:[#allocation8 + $0x84] sm:$0xf]
    %v3254 = vld [vmem:[#allocation8 + $0x88] sm:$0xf]
    %v3255 = vld [vmem:[#allocation8 + $0x8c] sm:$0xf]
    %v3256 = vld [vmem:[#allocation8 + $0x90] sm:$0xf]
    %v3257 = vld [vmem:[#allocation8 + $0x94] sm:$0xf]
    %v3258 = vld [vmem:[#allocation8 + $0x98] sm:$0xf]
    %v3259 = vld [vmem:[#allocation8 + $0x9c] sm:$0xf]
    %v3260 = vld [vmem:[#allocation8 + $0xa0] sm:$0xf]
    %v3261 = vld [vmem:[#allocation8 + $0xa4] sm:$0xf]
    %v3262 = vld [vmem:[#allocation8 + $0xa8] sm:$0xf]
    %v3263 = vld [vmem:[#allocation8 + $0xac] sm:$0xf]
    %v3264 = vld [vmem:[#allocation8 + $0xb0] sm:$0xf]
    %v3265 = vld [vmem:[#allocation8 + $0xb4] sm:$0xf]
    %v3266 = vld [vmem:[#allocation8 + $0xb8] sm:$0xf]
    %v3267 = vld [vmem:[#allocation8 + $0xbc] sm:$0xf]
    %v3268 = vld [vmem:[#allocation8 + $0xc0] sm:$0xf]
    %v3269 = vld [vmem:[#allocation8 + $0xc4] sm:$0xf]
    %v3270 = vld [vmem:[#allocation8 + $0xc8] sm:$0xf]
    %v3271 = vld [vmem:[#allocation8 + $0xcc] sm:$0xf]
    %v3272 = vld [vmem:[#allocation8 + $0xd0] sm:$0xf]
    %v3273 = vld [vmem:[#allocation8 + $0xd4] sm:$0xf]
    %v3274 = vld [vmem:[#allocation8 + $0xd8] sm:$0xf]
    %v3275 = vld [vmem:[#allocation8 + $0xdc] sm:$0xf]
    %v3276 = vld [vmem:[#allocation8 + $0xe0] sm:$0xf]
    %v3277 = vld [vmem:[#allocation8 + $0xe4] sm:$0xf]
    %v3278 = vld [vmem:[#allocation8 + $0xe8] sm:$0xf]
    %v3279 = vld [vmem:[#allocation8 + $0xec] sm:$0xf]
    %v3280 = vld [vmem:[#allocation8 + $0xf0] sm:$0xf]
    %v3281 = vld [vmem:[#allocation8 + $0xf4] sm:$0xf]
    %v3282 = vld [vmem:[#allocation8 + $0xf8] sm:$0xf]
    %v3283 = vld [vmem:[#allocation8 + $0xfc] sm:$0xf]
    %v3284 = vld [vmem:[#allocation10] sm:$0x1]
    %v3286 = vperm.slane %v3284, 0
    %v3352 = vunpack.c.l.b16 %v3220
    %v3353 = vunpack.c.l.b16 %v3221
    %v3354 = vunpack.c.l.b16 %v3222
    %v3355 = vunpack.c.l.b16 %v3223
    %v3356 = vunpack.c.l.b16 %v3224
    %v3357 = vunpack.c.l.b16 %v3225
    %v3358 = vunpack.c.l.b16 %v3226
    %v3359 = vunpack.c.l.b16 %v3227
    %v3360 = vunpack.c.l.b16 %v3228
    %v3361 = vunpack.c.l.b16 %v3229
    %v3362 = vunpack.c.l.b16 %v3230
    %v3363 = vunpack.c.l.b16 %v3231
    %v3364 = vunpack.c.l.b16 %v3232
    %v3365 = vunpack.c.l.b16 %v3233
    %v3366 = vunpack.c.l.b16 %v3234
    %v3367 = vunpack.c.l.b16 %v3235
    %v3368 = vunpack.c.l.b16 %v3236
    %v3369 = vunpack.c.l.b16 %v3237
    %v3370 = vunpack.c.l.b16 %v3238
    %v3371 = vunpack.c.l.b16 %v3239
    %v3372 = vunpack.c.l.b16 %v3240
    %v3373 = vunpack.c.l.b16 %v3241
    %v3374 = vunpack.c.l.b16 %v3242
    %v3375 = vunpack.c.l.b16 %v3243
    %v3376 = vunpack.c.l.b16 %v3244
    %v3377 = vunpack.c.l.b16 %v3245
    %v3378 = vunpack.c.l.b16 %v3246
    %v3379 = vunpack.c.l.b16 %v3247
    %v3380 = vunpack.c.l.b16 %v3248
    %v3381 = vunpack.c.l.b16 %v3249
    %v3382 = vunpack.c.l.b16 %v3250
    %v3383 = vunpack.c.l.b16 %v3251
    %v3384 = vunpack.c.l.b16 %v3252
    %v3385 = vunpack.c.l.b16 %v3253
    %v3386 = vunpack.c.l.b16 %v3254
    %v3387 = vunpack.c.l.b16 %v3255
    %v3388 = vunpack.c.l.b16 %v3256
    %v3389 = vunpack.c.l.b16 %v3257
    %v3390 = vunpack.c.l.b16 %v3258
    %v3391 = vunpack.c.l.b16 %v3259
    %v3392 = vunpack.c.l.b16 %v3260
    %v3393 = vunpack.c.l.b16 %v3261
    %v3394 = vunpack.c.l.b16 %v3262
    %v3395 = vunpack.c.l.b16 %v3263
    %v3396 = vunpack.c.l.b16 %v3264
    %v3397 = vunpack.c.l.b16 %v3265
    %v3398 = vunpack.c.l.b16 %v3266
    %v3399 = vunpack.c.l.b16 %v3267
    %v3400 = vunpack.c.l.b16 %v3268
    %v3401 = vunpack.c.l.b16 %v3269
    %v3402 = vunpack.c.l.b16 %v3270
    %v3403 = vunpack.c.l.b16 %v3271
    %v3404 = vunpack.c.l.b16 %v3272
    %v3405 = vunpack.c.l.b16 %v3273
    %v3406 = vunpack.c.l.b16 %v3274
    %v3407 = vunpack.c.l.b16 %v3275
    %v3408 = vunpack.c.l.b16 %v3276
    %v3409 = vunpack.c.l.b16 %v3277
    %v3410 = vunpack.c.l.b16 %v3278
    %v3411 = vunpack.c.l.b16 %v3279
    %v3412 = vunpack.c.l.b16 %v3280
    %v3413 = vunpack.c.l.b16 %v3281
    %v3414 = vunpack.c.l.b16 %v3282
    %v3415 = vunpack.c.l.b16 %v3283
    %v3416 = vpack.c.b16 %v3353, %v3352
    %v3417 = vpack.c.b16 %v3355, %v3354
    %v3418 = vpack.c.b16 %v3357, %v3356
    %v3419 = vpack.c.b16 %v3359, %v3358
    %v3420 = vpack.c.b16 %v3361, %v3360
    %v3421 = vpack.c.b16 %v3363, %v3362
    %v3422 = vpack.c.b16 %v3365, %v3364
    %v3423 = vpack.c.b16 %v3367, %v3366
    %v3424 = vpack.c.b16 %v3369, %v3368
    %v3425 = vpack.c.b16 %v3371, %v3370
    %v3426 = vpack.c.b16 %v3373, %v3372
    %v3427 = vpack.c.b16 %v3375, %v3374
    %v3428 = vpack.c.b16 %v3377, %v3376
    %v3429 = vpack.c.b16 %v3379, %v3378
    %v3430 = vpack.c.b16 %v3381, %v3380
    %v3431 = vpack.c.b16 %v3383, %v3382
    %v3432 = vpack.c.b16 %v3385, %v3384
    %v3433 = vpack.c.b16 %v3387, %v3386
    %v3434 = vpack.c.b16 %v3389, %v3388
    %v3435 = vpack.c.b16 %v3391, %v3390
    %v3436 = vpack.c.b16 %v3393, %v3392
    %v3437 = vpack.c.b16 %v3395, %v3394
    %v3438 = vpack.c.b16 %v3397, %v3396
    %v3439 = vpack.c.b16 %v3399, %v3398
    %v3440 = vpack.c.b16 %v3401, %v3400
    %v3441 = vpack.c.b16 %v3403, %v3402
    %v3442 = vpack.c.b16 %v3405, %v3404
    %v3443 = vpack.c.b16 %v3407, %v3406
    %v3444 = vpack.c.b16 %v3409, %v3408
    %v3445 = vpack.c.b16 %v3411, %v3410
    %v3446 = vpack.c.b16 %v3413, %v3412
    %v3447 = vpack.c.b16 %v3415, %v3414
    %3480 = vmatpush.bf16.msra.mxu0 %v3423
    %3481 = vmatpush.bf16.msra.mxu0 %v3422
    %3482 = vmatpush.bf16.msra.mxu0 %v3421
    %3483 = vmatpush.bf16.msra.mxu0 %v3420
    %3484 = vmatpush.bf16.msra.mxu0 %v3419
    %3485 = vmatpush.bf16.msra.mxu0 %v3418
    %3486 = vmatpush.bf16.msra.mxu0 %v3417
    %3487 = vmatpush.bf16.msra.mxu0 %v3416
    %3488 = vmatmul.bf16.gmra.mxu0 %v3216
    %v3489 = vpop.f32.mrf.mxu0
    %v3490 = vadd.f32 %v3286, %v3489
    %v3491 = vpop.f32.mrf.mxu0
    %3492 = vdwg.mxu0
    %3493 = vmatpush.bf16.msra.mxu0 %v3431
    %3494 = vmatpush.bf16.msra.mxu0 %v3430
    %3495 = vmatpush.bf16.msra.mxu0 %v3429
    %3496 = vmatpush.bf16.msra.mxu0 %v3428
    %3497 = vmatpush.bf16.msra.mxu0 %v3427
    %3498 = vmatpush.bf16.msra.mxu0 %v3426
    %3499 = vmatpush.bf16.msra.mxu0 %v3425
    %3500 = vmatpush.bf16.msra.mxu0 %v3424
    %3501 = vmatmul.bf16.gmra.mxu0 %v3217
    %v3502 = vpop.f32.mrf.mxu0
    %v3503 = vadd.f32 %v3490, %v3502
    %v3504 = vpop.f32.mrf.mxu0
    %3505 = vdwg.mxu0
    %3506 = vmatpush.bf16.msra.mxu0 %v3439
    %3507 = vmatpush.bf16.msra.mxu0 %v3438
    %3508 = vmatpush.bf16.msra.mxu0 %v3437
    %3509 = vmatpush.bf16.msra.mxu0 %v3436
    %3510 = vmatpush.bf16.msra.mxu0 %v3435
    %3511 = vmatpush.bf16.msra.mxu0 %v3434
    %3512 = vmatpush.bf16.msra.mxu0 %v3433
    %3513 = vmatpush.bf16.msra.mxu0 %v3432
    %3514 = vmatmul.bf16.gmra.mxu0 %v3218
    %v3515 = vpop.f32.mrf.mxu0
    %v3516 = vadd.f32 %v3503, %v3515
    %v3517 = vpop.f32.mrf.mxu0
    %3518 = vdwg.mxu0
    %3519 = vmatpush.bf16.msra.mxu0 %v3447
    %3520 = vmatpush.bf16.msra.mxu0 %v3446
    %3521 = vmatpush.bf16.msra.mxu0 %v3445
    %3522 = vmatpush.bf16.msra.mxu0 %v3444
    %3523 = vmatpush.bf16.msra.mxu0 %v3443
    %3524 = vmatpush.bf16.msra.mxu0 %v3442
    %3525 = vmatpush.bf16.msra.mxu0 %v3441
    %3526 = vmatpush.bf16.msra.mxu0 %v3440
    %3527 = vmatmul.bf16.gmra.mxu0 %v3219
    %v3528 = vpop.f32.mrf.mxu0
    %v3529 = vadd.f32 %v3516, %v3528
    %v3530 = vpop.f32.mrf.mxu0
    %3531 = vdwg.mxu0
    %3532 = vst [vmem:[#allocation11] sm:$0xff] %v3529
    // Predicated region
    $region42: #{classifier_forward.1} parent=1 // pred_check
      _
    $region43: #{classifier_forward.1} parent=1 // pred_check_branch
      %3534 = sbr.rel (0) target = $region45
    $region44: #{classifier_forward.1} parent=1 // pred_region
      %3536 = vsyncadd [#allocation4], 96
      %s3537 = sshll.u32 [#allocation11], 4
      %s3538 = int_to_ptr.vmem [resolvable:$true] %s3537
      %s3539 = sshll.u32 %s5, 4
      %s3540 = int_to_ptr.hbm [resolvable:$true] %s3539
      %3545 = dma.vmem_to_hbm [thread:$0]  %s3538, 32, %s3540, [#allocation4], 32, 32, 2
    $region45: #{classifier_forward.1} parent=1 // pred_fallthru
      _
    // Predicated region
    $region46: #{classifier_forward.1} parent=1 // pred_check
      _
    $region47: #{classifier_forward.1} parent=1 // pred_check_branch
      %3547 = sbr.rel (0) target = $region49
    $region48: #{classifier_forward.1} parent=1 // pred_region
      %3549 = dma.done [#allocation4], 128
    $region49: #{classifier_forward.1} parent=1 // pred_fallthru
      _
    %3550 = vsyncpa [#allocation3], 1
    %3551 = vsyncpa [#allocation6], 1
    %3552 = vsyncpa [#allocation9], 1
    %3553 = vsyncpa [#allocation4], 1

</llo_original>
